<compile_context>
chip_gen: v7x
topology: tpu7x:2x2x1
jax: 0.10.0
libtpu: 0.0.40
codegen_flags: <defaults>
</compile_context>

<pallas_src>
import functools

import jax
import jax.numpy as jnp
from jax import lax
from jax.experimental import pallas as pl
from jax.experimental.pallas import tpu as pltpu

DIM = 32
EPS = 1e-5
_DN0 = (((0,), (0,)), ((), ()))  # dot_general: contract dim 0 of both operands


# --------------------------------------------------------------------------- #
# shared math helpers (used by both the kernel and the pure-JAX reference)
# --------------------------------------------------------------------------- #
def _softplus(x):
    # PyTorch F.softplus(beta=1, threshold=20)
    return jnp.where(x > 20.0, x, jnp.log(1.0 + jnp.exp(jnp.minimum(x, 20.0))))


def _bn_train(h, gamma, beta, axis):
    # nn.BatchNorm1d in training mode: batch mean, biased variance, eps=1e-5.
    mu = jnp.mean(h, axis=axis, keepdims=True)
    var = jnp.mean(jnp.square(h - mu), axis=axis, keepdims=True)
    return gamma * (h - mu) * lax.rsqrt(var + EPS) + beta


def _split_bf16(x):
    # hi/lo bf16 split of an f32 array (near-f32 accuracy with bf16 MXU passes)
    hi = x.astype(jnp.bfloat16)
    lo = (x - hi.astype(jnp.float32)).astype(jnp.bfloat16)
    return hi, lo


# --------------------------------------------------------------------------- #
# kernel, node-major orientation ([N, d] everywhere) -- used when N < 128
# --------------------------------------------------------------------------- #
def _megnet_node_kernel_nd(x_ref, src_ref, ea_ref, state_ref, batch_ref,
                           wm_ref, vp_ref, out_ref, sum_ref, cnt_ref,
                           *, e_total, ragged):
    k = pl.program_id(0)
    n_steps = pl.num_programs(0)
    N, d = x_ref.shape
    TE = ea_ref.shape[0]
    B = state_ref.shape[0]

    @pl.when(k == 0)
    def _():
        sum_ref[...] = jnp.zeros_like(sum_ref)
        cnt_ref[...] = jnp.zeros_like(cnt_ref)

    # --- edge tile: zero out-of-range rows of the ragged tail so stale VMEM
    #     (possibly NaN/Inf) can never leak into the scatter matmul. ----------
    ea = ea_ref[...]                                                  # [TE, d]
    if ragged:
        e_ids = lax.broadcasted_iota(jnp.int32, (TE, 1), 0) + k * TE
        valid = e_ids < e_total                                       # [TE, 1]
        ea = jnp.where(valid, ea, 0.0)
        cvec = valid.astype(jnp.bfloat16)                             # [TE, 1]
    else:
        cvec = jnp.ones((TE, 1), jnp.bfloat16)

    # --- one-hot scatter mask: one compare + one convert per element. --------
    node_ids = lax.broadcasted_iota(jnp.int32, (N, 1), 0)             # [N, 1]
    onehot = (node_ids == src_ref[...]).astype(jnp.bfloat16)          # [N, TE]

    # --- bf16 hi/lo scatter matmuls (f32 accumulation) + exact edge count. ---
    ea_hi, ea_lo = _split_bf16(ea)
    sum_ref[...] += (
        jnp.dot(onehot, ea_hi, preferred_element_type=jnp.float32)
        + jnp.dot(onehot, ea_lo, preferred_element_type=jnp.float32))
    cnt_ref[...] += jnp.dot(onehot, cvec, preferred_element_type=jnp.float32)

    # --- finalize on the last E-tile: mean, gather, fused MLP ----------------
    @pl.when(k == n_steps - 1)
    def _():
        v_mean = sum_ref[...] / jnp.maximum(cnt_ref[...], 1.0)        # [N, d]

        bid = batch_ref[...]                                          # [N, 1]
        s_g = jnp.zeros((N, d), jnp.float32)
        for b in range(B):  # B tiny; TODO(synk): one-hot matmul if B >= 16
            m = (bid == b).astype(jnp.float32)                        # [N, 1]
            s_g = s_g + m * state_ref[b:b + 1, :]                     # [N, d]

        w1 = wm_ref[0:3 * d, :]
        w2 = wm_ref[3 * d:4 * d, :]
        w3 = wm_ref[4 * d:5 * d, :]
        b1, g1, bb1 = vp_ref[0:1, :], vp_ref[1:2, :], vp_ref[2:3, :]
        b2, g2, bb2 = vp_ref[3:4, :], vp_ref[4:5, :], vp_ref[5:6, :]
        b3, g3, bb3 = vp_ref[6:7, :], vp_ref[7:8, :], vp_ref[8:9, :]

        comb = jnp.concatenate([x_ref[...], v_mean, s_g], axis=1)     # [N, 3d]
        hp = jax.lax.Precision.HIGHEST
        h = jnp.dot(comb, w1, precision=hp,
                    preferred_element_type=jnp.float32) + b1
        h = _bn_train(_softplus(h), g1, bb1, axis=0)
        h = jnp.dot(h, w2, precision=hp,
                    preferred_element_type=jnp.float32) + b2
        h = _bn_train(_softplus(h), g2, bb2, axis=0)
        h = jnp.dot(h, w3, precision=hp,
                    preferred_element_type=jnp.float32) + b3
        h = _bn_train(h, g3, bb3, axis=0)
        out_ref[...] = h.astype(out_ref.dtype)


# --------------------------------------------------------------------------- #
# kernel, feature-major orientation ([d, N]) -- N rides the MXU column / lane
# axis; used when N >= 128 (lane-dense scatter and epilogue).
# --------------------------------------------------------------------------- #
def _megnet_node_kernel_dn(xt_ref, src_ref, ea_ref, statet_ref, batch_ref,
                           wmt_ref, vpt_ref, out_ref, sum_ref, cnt_ref,
                           *, e_total, ragged):
    k = pl.program_id(0)
    n_steps = pl.num_programs(0)
    d, N = xt_ref.shape
    TE = ea_ref.shape[0]
    B = statet_ref.shape[1]

    @pl.when(k == 0)
    def _():
        sum_ref[...] = jnp.zeros_like(sum_ref)
        cnt_ref[...] = jnp.zeros_like(cnt_ref)

    ea = ea_ref[...]                                                  # [TE, d]
    if ragged:
        e_ids = lax.broadcasted_iota(jnp.int32, (TE, 1), 0) + k * TE
        valid = e_ids < e_total
        ea = jnp.where(valid, ea, 0.0)
        cvec = valid.astype(jnp.bfloat16)                             # [TE, 1]
    else:
        cvec = jnp.ones((TE, 1), jnp.bfloat16)

    node_ids = lax.broadcasted_iota(jnp.int32, (1, N), 1)             # [1, N]
    onehot_t = (src_ref[...] == node_ids).astype(jnp.bfloat16)        # [TE, N]

    # accT[d, N] += ea^T @ onehot^T: contract the edge axis (dim 0 of both) so
    # N is on the MXU column / lane axis (full column utilisation for N>=128).
    ea_hi, ea_lo = _split_bf16(ea)
    sum_ref[...] += (
        lax.dot_general(ea_hi, onehot_t, _DN0,
                        preferred_element_type=jnp.float32)
        + lax.dot_general(ea_lo, onehot_t, _DN0,
                          preferred_element_type=jnp.float32))
    cnt_ref[...] += lax.dot_general(cvec, onehot_t, _DN0,
                                    preferred_element_type=jnp.float32)

    @pl.when(k == n_steps - 1)
    def _():
        v_mean_t = sum_ref[...] / jnp.maximum(cnt_ref[...], 1.0)      # [d, N]

        bid = batch_ref[...]                                          # [1, N]
        s_g_t = jnp.zeros((d, N), jnp.float32)
        for b in range(B):
            m = (bid == b).astype(jnp.float32)                        # [1, N]
            s_g_t = s_g_t + m * statet_ref[:, b:b + 1]                # [d, N]

        w1t = wmt_ref[:, 0:3 * d]
        w2t = wmt_ref[:, 3 * d:4 * d]
        w3t = wmt_ref[:, 4 * d:5 * d]
        b1, g1, bb1 = vpt_ref[:, 0:1], vpt_ref[:, 1:2], vpt_ref[:, 2:3]
        b2, g2, bb2 = vpt_ref[:, 3:4], vpt_ref[:, 4:5], vpt_ref[:, 5:6]
        b3, g3, bb3 = vpt_ref[:, 6:7], vpt_ref[:, 7:8], vpt_ref[:, 8:9]

        comb_t = jnp.concatenate([xt_ref[...], v_mean_t, s_g_t], axis=0)
        hp = jax.lax.Precision.HIGHEST
        h = jnp.dot(w1t, comb_t, precision=hp,
                    preferred_element_type=jnp.float32) + b1
        h = _bn_train(_softplus(h), g1, bb1, axis=1)
        h = jnp.dot(w2t, h, precision=hp,
                    preferred_element_type=jnp.float32) + b2
        h = _bn_train(_softplus(h), g2, bb2, axis=1)
        h = jnp.dot(w3t, h, precision=hp,
                    preferred_element_type=jnp.float32) + b3
        h = _bn_train(h, g3, bb3, axis=1)
        out_ref[...] = h.astype(out_ref.dtype)


# --------------------------------------------------------------------------- #
# wrapper: generation-aware tiling / VMEM accounting + pallas_call
# --------------------------------------------------------------------------- #
def _round_up(x, m):
    return (x + m - 1) // m * m


def _padded_bytes(shape, dtype):
    shape = tuple(int(s) for s in shape)
    if len(shape) == 1:
        shape = (1,) + shape
    lead = 1
    for v in shape[:-2]:
        lead *= v
    return (lead * _round_up(shape[-2], 8) * _round_up(shape[-1], 128)
            * jnp.dtype(dtype).itemsize)


def _tpu_budgets():
    # v5e/v6e: 128 MiB physical VMEM; v7x: 64 MiB.  Fall back conservatively.
    try:
        cap = int(pltpu.get_tpu_info().vmem_capacity_bytes)
    except Exception:
        cap = 64 * 1024 * 1024
    if cap >= 100 * 1024 * 1024:           # v5e / v6e
        return dict(vmem_limit=96 * 1024 * 1024,
                    mask_budget=24 * 1024 * 1024, te_cap=8192)
    return dict(vmem_limit=48 * 1024 * 1024,   # v7x (or unknown)
                mask_budget=8 * 1024 * 1024, te_cap=4096)


def _vmem_estimate(N, d, B, te, transposed):
    f32, bf16, i32 = jnp.float32, jnp.bfloat16, jnp.int32
    if transposed:
        resident = [((d, N), f32), ((d, N), f32), ((d, B), f32),
                    ((1, N), i32), ((d, 5 * d), f32), ((d, 9), f32)]
        scratch = [((d, N), f32), ((1, N), f32)]
        stream = [((te, 1), i32), ((te, d), f32)]
        mask = ((te, N), bf16)
        comb = ((3 * d, N), f32)
    else:
        resident = [((N, d), f32), ((N, d), f32), ((B, d), f32),
                    ((N, 1), i32), ((5 * d, d), f32), ((9, d), f32)]
        scratch = [((N, d), f32), ((N, 1), f32)]
        stream = [((1, te), i32), ((te, d), f32)]
        mask = ((N, te), bf16)
        comb = ((N, 3 * d), f32)
    total = 0
    for s, t in resident:
        total += 2 * _padded_bytes(s, t)         # conservatively double-buffered
    for s, t in scratch:
        total += _padded_bytes(s, t)
    for s, t in stream:
        total += 2 * _padded_bytes(s, t)         # pipeline double buffers
    total += 3 * _padded_bytes(*mask)            # one-hot + compare temporaries
    total += 3 * _padded_bytes((te, d), bf16)    # hi/lo/masked edge tiles
    total += 4 * _padded_bytes(*comb)            # epilogue temporaries
    return total


def megnet_node(x, edge_index, edge_attr, state, batch, params, *,
                te=None, transposed=None):
    N, d = int(x.shape[0]), int(x.shape[1])
    E = int(edge_attr.shape[0])
    B = int(state.shape[0])

    if transposed is None:
        transposed = N >= 128   # lane-dense orientation only pays off for wide N

    budgets = _tpu_budgets()

    # E-tile choice: lane-aligned, bounded by a generation-aware mask budget.
    if te is None:
        te = (budgets["mask_budget"] // (4 * max(_round_up(N, 8), 8))) // 128 * 128
        te = max(128, min(te, budgets["te_cap"]))
    te = max(128, min(int(te), _round_up(E, 128)))
    te = _round_up(te, 128)

    # Shrink te until the plan provably fits the per-generation VMEM budget.
    margin = 4 * 1024 * 1024
    while te > 128 and (_vmem_estimate(N, d, B, te, transposed) + margin
                        > budgets["vmem_limit"]):
        te = max(128, te // 2)
    if _vmem_estimate(N, d, B, te, transposed) + margin > budgets["vmem_limit"]:
        # TODO(synk): tile N with a two-pass BatchNorm (sum / sum-of-squares
        # accumulation + finalize) instead of failing for very large N.
        raise ValueError("MEGNet_Node Pallas plan does not fit VMEM: N too "
                         "large for the single-pass BatchNorm kernel")

    num_e_tiles = int(pl.cdiv(E, te))
    ragged = (E % te) != 0

    x = x.astype(jnp.float32)
    edge_attr = edge_attr.astype(jnp.float32)
    state = state.astype(jnp.float32)
    src = edge_index[0, :].astype(jnp.int32)
    batch = batch.astype(jnp.int32)

    resident = lambda shape: pl.BlockSpec(shape, lambda k: (0, 0))
    vmem_limit = budgets["vmem_limit"]
    # NOTE: edge-tile BlockSpecs could take pipeline_mode=pl.Buffered(3) if
    # profiling ever shows exposed DMA on the edge stream (not needed so far).

    if not transposed:
        src2 = src.reshape(1, E)
        batch2 = batch.reshape(N, 1)
        wm = jnp.concatenate([params["w1"], params["w2"], params["w3"]], axis=0)
        vp = jnp.concatenate([params["b1"], params["g1"], params["beta1"],
                              params["b2"], params["g2"], params["beta2"],
                              params["b3"], params["g3"], params["beta3"]],
                             axis=0)
        kernel = functools.partial(_megnet_node_kernel_nd,
                                   e_total=E, ragged=ragged)
        grid_spec = pltpu.PrefetchScalarGridSpec(
            num_scalar_prefetch=0,
            grid=(num_e_tiles,),
            in_specs=[
                resident((N, d)),                               # x
                pl.BlockSpec((1, te), lambda k: (0, k)),        # src (E-tiled)
                pl.BlockSpec((te, d), lambda k: (k, 0)),        # edge_attr
                resident((B, d)),                               # state
                resident((N, 1)),                               # batch
                resident((5 * d, d)),                           # packed weights
                resident((9, d)),                               # packed vectors
            ],
            out_specs=pl.BlockSpec((N, d), lambda k: (0, 0)),
            scratch_shapes=[pltpu.VMEM((N, d), jnp.float32),    # edge-attr sum
                            pltpu.VMEM((N, 1), jnp.float32)],   # edge count
        )
        out = pl.pallas_call(
            kernel,
            out_shape=jax.ShapeDtypeStruct((N, d), jnp.float32),
            grid_spec=grid_spec,
            compiler_params=pltpu.CompilerParams(
                dimension_semantics=("arbitrary",),
                vmem_limit_bytes=vmem_limit),
        )(x, src2, edge_attr, state, batch2, wm, vp)
        return out

    # ---- feature-major (transposed, lane-dense) path -----------------------
    xt = x.T                                                         # [d, N]
    statet = state.T                                                 # [d, B]
    src2 = src.reshape(E, 1)
    batch2 = batch.reshape(1, N)
    wmt = jnp.concatenate([params["w1"].T, params["w2"].T, params["w3"].T],
                          axis=1)                                    # [d, 5d]
    vpt = jnp.concatenate([params["b1"].T, params["g1"].T, params["beta1"].T,
                           params["b2"].T, params["g2"].T, params["beta2"].T,
                           params["b3"].T, params["g3"].T, params["beta3"].T],
                          axis=1)                                    # [d, 9]
    kernel = functools.partial(_megnet_node_kernel_dn,
                               e_total=E, ragged=ragged)
    grid_spec = pltpu.PrefetchScalarGridSpec(
        num_scalar_prefetch=0,
        grid=(num_e_tiles,),
        in_specs=[
            resident((d, N)),                                   # x^T
            pl.BlockSpec((te, 1), lambda k: (k, 0)),            # src (E-tiled)
            pl.BlockSpec((te, d), lambda k: (k, 0)),            # edge_attr
            resident((d, B)),                                   # state^T
            resident((1, N)),                                   # batch
            resident((d, 5 * d)),                               # packed weights^T
            resident((d, 9)),                                   # packed vectors^T
        ],
        out_specs=pl.BlockSpec((d, N), lambda k: (0, 0)),
        scratch_shapes=[pltpu.VMEM((d, N), jnp.float32),
                        pltpu.VMEM((1, N), jnp.float32)],
    )
    out_t = pl.pallas_call(
        kernel,
        out_shape=jax.ShapeDtypeStruct((d, N), jnp.float32),
        grid_spec=grid_spec,
        compiler_params=pltpu.CompilerParams(
            dimension_semantics=("arbitrary",),
            vmem_limit_bytes=vmem_limit),
    )(xt, src2, edge_attr, statet, batch2, wmt, vpt)
    return out_t.T                      # single lane-dense transpose at the end


# --------------------------------------------------------------------------- #
# pure-JAX reference of the PyTorch forward (training-mode BatchNorm)
# --------------------------------------------------------------------------- #
def reference(x, edge_index, edge_attr, state, batch, p):
    N = x.shape[0]
    src = edge_index[0]
    v_sum = jax.ops.segment_sum(edge_attr, src, num_segments=N)
    cnt = jax.ops.segment_sum(jnp.ones((edge_attr.shape[0],), jnp.float32),
                              src, num_segments=N)
    v_mean = v_sum / jnp.maximum(cnt, 1.0)[:, None]
    comb = jnp.concatenate([x, v_mean, state[batch]], axis=1)

    h = comb @ p["w1"] + p["b1"]
    h = _bn_train(_softplus(h), p["g1"], p["beta1"], axis=0)
    h = h @ p["w2"] + p["b2"]
    h = _bn_train(_softplus(h), p["g2"], p["beta2"], axis=0)
    h = h @ p["w3"] + p["b3"]
    h = _bn_train(h, p["g3"], p["beta3"], axis=0)
    return h


def init_params(key, dim=DIM):
    ks = jax.random.split(key, 6)
    s1 = 1.0 / jnp.sqrt(3.0 * dim)
    s = 1.0 / jnp.sqrt(float(dim))
    return {
        # Linear weights stored as [in, out] so y = x @ W + b.
        "w1": jax.random.uniform(ks[0], (3 * dim, dim), jnp.float32, -s1, s1),
        "b1": jax.random.uniform(ks[1], (1, dim), jnp.float32, -s1, s1),
        "g1": jnp.ones((1, dim), jnp.float32),
        "beta1": jnp.zeros((1, dim), jnp.float32),
        "w2": jax.random.uniform(ks[2], (dim, dim), jnp.float32, -s, s),
        "b2": jax.random.uniform(ks[3], (1, dim), jnp.float32, -s, s),
        "g2": jnp.ones((1, dim), jnp.float32),
        "beta2": jnp.zeros((1, dim), jnp.float32),
        "w3": jax.random.uniform(ks[4], (dim, dim), jnp.float32, -s, s),
        "b3": jax.random.uniform(ks[5], (1, dim), jnp.float32, -s, s),
        "g3": jnp.ones((1, dim), jnp.float32),
        "beta3": jnp.zeros((1, dim), jnp.float32),
    }


if __name__ == "__main__":
    key = jax.random.PRNGKey(0)
    k_x, k_e, k_s, k_idx, k_p = jax.random.split(key, 5)

    N, E, B, dim = 16, 48, 2, DIM
    x = jax.random.normal(k_x, (N, dim), jnp.float32)
    edge_attr = jax.random.normal(k_e, (E, dim), jnp.float32)
    state = jax.random.normal(k_s, (B, dim), jnp.float32)
    edge_index = jax.random.randint(k_idx, (2, E), 0, N).astype(jnp.int32)
    batch = jnp.concatenate([jnp.zeros((N // 2,), jnp.int32),
                             jnp.ones((N - N // 2,), jnp.int32)])
    params = init_params(k_p, dim)

    ref = reference(x, edge_index, edge_attr, state, batch, params)

    # 1) default node-major path (chosen automatically for N < 128)
    out = jax.block_until_ready(
        megnet_node(x, edge_index, edge_attr, state, batch, params))
    assert out.shape == (N, dim)
    assert jnp.allclose(out, ref, atol=1e-4, rtol=1e-4), "node-major mismatch"

    # 2) feature-major (lane-dense) path, forced for coverage at small N
    out_t = jax.block_until_ready(
        megnet_node(x, edge_index, edge_attr, state, batch, params,
                    transposed=True))
    assert jnp.allclose(out_t, ref, atol=1e-4, rtol=1e-4), "feature-major mismatch"

    # 3) multi-tile + ragged edge stream (te=128 -> 3 tiles, last one partial)
    E2 = 300
    k_e2, k_i2 = jax.random.split(k_e)
    edge_attr2 = jax.random.normal(k_e2, (E2, dim), jnp.float32)
    edge_index2 = jax.random.randint(k_i2, (2, E2), 0, N).astype(jnp.int32)
    ref2 = reference(x, edge_index2, edge_attr2, state, batch, params)
    out2 = jax.block_until_ready(
        megnet_node(x, edge_index2, edge_attr2, state, batch, params, te=128))
    assert jnp.allclose(out2, ref2, atol=1e-4, rtol=1e-4), "multi-tile mismatch"

    print("KERNEL_OK")
</pallas_src>

<mosaic_0001>
module attributes {stable_mosaic.version = 11 : i64} {
  func.func @_megnet_node_kernel_nd(%arg0: i32, %arg1: memref<16x32xf32, #tpu.memory_space<vmem>>, %arg2: memref<1x128xi32, #tpu.memory_space<vmem>>, %arg3: memref<128x32xf32, #tpu.memory_space<vmem>>, %arg4: memref<2x32xf32, #tpu.memory_space<vmem>>, %arg5: memref<16x1xi32, #tpu.memory_space<vmem>>, %arg6: memref<160x32xf32, #tpu.memory_space<vmem>>, %arg7: memref<9x32xf32, #tpu.memory_space<vmem>>, %arg8: memref<16x32xf32, #tpu.memory_space<vmem>>, %arg9: memref<16x32xf32, #tpu.memory_space<vmem>>, %arg10: memref<16x1xf32, #tpu.memory_space<vmem>>) attributes {dimension_semantics = [#tpu.dimension_semantics<arbitrary>], iteration_bounds = array<i64: 1>, scalar_prefetch = 0 : i64, scratch_operands = 2 : i64, tpu.core_type = #tpu.core_type<tc>, window_params = [{pipeline_mode = #tpu.pipeline_mode<synchronous>, transform_indices = @transform_0, window_bounds = array<i64: 16, 32>}, {transform_indices = @transform_1, window_bounds = array<i64: 1, 128>}, {transform_indices = @transform_2, window_bounds = array<i64: 128, 32>}, {pipeline_mode = #tpu.pipeline_mode<synchronous>, transform_indices = @transform_3, window_bounds = array<i64: 2, 32>}, {pipeline_mode = #tpu.pipeline_mode<synchronous>, transform_indices = @transform_4, window_bounds = array<i64: 16, 1>}, {pipeline_mode = #tpu.pipeline_mode<synchronous>, transform_indices = @transform_5, window_bounds = array<i64: 160, 32>}, {pipeline_mode = #tpu.pipeline_mode<synchronous>, transform_indices = @transform_6, window_bounds = array<i64: 9, 32>}, {pipeline_mode = #tpu.pipeline_mode<synchronous>, transform_indices = @transform_7, window_bounds = array<i64: 16, 32>}]} {
    %c0_i32 = arith.constant 0 : i32
    %0 = arith.cmpi eq, %arg0, %c0_i32 : i32
    %1 = arith.extui %0 : i1 to i32
    %c0_i32_0 = arith.constant 0 : i32
    %2 = arith.cmpi ne, %1, %c0_i32_0 : i32
    scf.if %2 {
      %cst_17 = arith.constant 0.000000e+00 : f32
      %42 = vector.broadcast %cst_17 : f32 to vector<16x32xf32>
      %c0_18 = arith.constant 0 : index
      %c0_19 = arith.constant 0 : index
      %43 = vector.load %arg9[%c0_18, %c0_19] : memref<16x32xf32, #tpu.memory_space<vmem>>, vector<16x32xf32>
      tpu.vector_store %arg9[%c0_18, %c0_19], %42 {strides = array<i32>} : memref<16x32xf32, #tpu.memory_space<vmem>>, vector<16x32xf32>,
      %cst_20 = arith.constant 0.000000e+00 : f32
      %44 = vector.broadcast %cst_20 : f32 to vector<16x1xf32>
      %c0_21 = arith.constant 0 : index
      %c0_22 = arith.constant 0 : index
      %45 = vector.load %arg10[%c0_21, %c0_22] : memref<16x1xf32, #tpu.memory_space<vmem>>, vector<16x1xf32>
      tpu.vector_store %arg10[%c0_21, %c0_22], %44 {strides = array<i32>} : memref<16x1xf32, #tpu.memory_space<vmem>>, vector<16x1xf32>,
    } else {
    }
    %c0 = arith.constant 0 : index
    %c0_1 = arith.constant 0 : index
    %3 = vector.load %arg3[%c0, %c0_1] : memref<128x32xf32, #tpu.memory_space<vmem>>, vector<128x32xf32>
    %4 = tpu.iota {dimensions = array<i32: 0>} : vector<128x1xi32>
    %c128_i32 = arith.constant 128 : i32
    %5 = arith.muli %arg0, %c128_i32 : i32
    %6 = vector.broadcast %5 : i32 to vector<128x1xi32>
    %7 = arith.addi %4, %6 : vector<128x1xi32>
    %c48_i32 = arith.constant 48 : i32
    %8 = vector.broadcast %c48_i32 : i32 to vector<128x1xi32>
    %9 = arith.cmpi slt, %7, %8 : vector<128x1xi32>
    %cst = arith.constant 0.000000e+00 : f32
    %10 = vector.shape_cast %9 : vector<128x1xi1> to vector<128x1xi1>
    %11 = vector.broadcast %10 : vector<128x1xi1> to vector<128x32xi1>
    %12 = vector.broadcast %cst : f32 to vector<128x32xf32>
    %13 = arith.select %11, %3, %12 : vector<128x32xi1>, vector<128x32xf32>
    %14 = arith.extui %9 : vector<128x1xi1> to vector<128x1xi32>
    %15 = arith.sitofp %14 : vector<128x1xi32> to vector<128x1xf32>
    %16 = arith.truncf %15 : vector<128x1xf32> to vector<128x1xbf16>
    %17 = tpu.iota {dimensions = array<i32: 0>} : vector<16x1xi32>
    %c0_2 = arith.constant 0 : index
    %c0_3 = arith.constant 0 : index
    %18 = vector.load %arg2[%c0_2, %c0_3] : memref<1x128xi32, #tpu.memory_space<vmem>>, vector<1x128xi32>
    %19 = vector.broadcast %17 : vector<16x1xi32> to vector<16x128xi32>
    %20 = vector.broadcast %18 : vector<1x128xi32> to vector<16x128xi32>
    %21 = arith.cmpi eq, %19, %20 : vector<16x128xi32>
    %22 = arith.extui %21 : vector<16x128xi1> to vector<16x128xi32>
    %23 = arith.sitofp %22 : vector<16x128xi32> to vector<16x128xf32>
    %24 = arith.truncf %23 : vector<16x128xf32> to vector<16x128xbf16>
    %25 = arith.truncf %13 : vector<128x32xf32> to vector<128x32xbf16>
    %26 = arith.extf %25 : vector<128x32xbf16> to vector<128x32xf32>
    %27 = arith.subf %13, %26 : vector<128x32xf32>
    %28 = arith.truncf %27 : vector<128x32xf32> to vector<128x32xbf16>
    %c0_4 = arith.constant 0 : index
    %c0_5 = arith.constant 0 : index
    %29 = vector.load %arg9[%c0_4, %c0_5] : memref<16x32xf32, #tpu.memory_space<vmem>>, vector<16x32xf32>
    %cst_6 = arith.constant dense<0.000000e+00> : vector<16x32xf32>
    %30 = tpu.matmul %24, %25, %cst_6 {dimension_numbers = #tpu.dot_dimension_numbers<[1], [0], [0], [1], [0, 0, 1, 1], [], []>} : vector<16x128xbf16>, vector<128x32xbf16>, vector<16x32xf32> -> vector<16x32xf32>
    %cst_7 = arith.constant dense<0.000000e+00> : vector<16x32xf32>
    %31 = tpu.matmul %24, %28, %cst_7 {dimension_numbers = #tpu.dot_dimension_numbers<[1], [0], [0], [1], [0, 0, 1, 1], [], []>} : vector<16x128xbf16>, vector<128x32xbf16>, vector<16x32xf32> -> vector<16x32xf32>
    %32 = arith.addf %30, %31 : vector<16x32xf32>
    %33 = arith.addf %29, %32 : vector<16x32xf32>
    %c0_8 = arith.constant 0 : index
    %c0_9 = arith.constant 0 : index
    %34 = vector.load %arg9[%c0_8, %c0_9] : memref<16x32xf32, #tpu.memory_space<vmem>>, vector<16x32xf32>
    tpu.vector_store %arg9[%c0_8, %c0_9], %33 {strides = array<i32>} : memref<16x32xf32, #tpu.memory_space<vmem>>, vector<16x32xf32>,
    %c0_10 = arith.constant 0 : index
    %c0_11 = arith.constant 0 : index
    %35 = vector.load %arg10[%c0_10, %c0_11] : memref<16x1xf32, #tpu.memory_space<vmem>>, vector<16x1xf32>
    %cst_12 = arith.constant dense<0.000000e+00> : vector<16x1xf32>
    %36 = tpu.matmul %24, %16, %cst_12 {dimension_numbers = #tpu.dot_dimension_numbers<[1], [0], [0], [1], [0, 0, 1, 1], [], []>} : vector<16x128xbf16>, vector<128x1xbf16>, vector<16x1xf32> -> vector<16x1xf32>
    %37 = arith.addf %35, %36 : vector<16x1xf32>
    %c0_13 = arith.constant 0 : index
    %c0_14 = arith.constant 0 : index
    %38 = vector.load %arg10[%c0_13, %c0_14] : memref<16x1xf32, #tpu.memory_space<vmem>>, vector<16x1xf32>
    tpu.vector_store %arg10[%c0_13, %c0_14], %37 {strides = array<i32>} : memref<16x1xf32, #tpu.memory_space<vmem>>, vector<16x1xf32>,
    %c0_i32_15 = arith.constant 0 : i32
    %39 = arith.cmpi eq, %arg0, %c0_i32_15 : i32
    %40 = arith.extui %39 : i1 to i32
    %c0_i32_16 = arith.constant 0 : i32
    %41 = arith.cmpi ne, %40, %c0_i32_16 : i32
    scf.if %41 {
      %c0_17 = arith.constant 0 : index
      %c0_18 = arith.constant 0 : index
      %42 = vector.load %arg9[%c0_17, %c0_18] : memref<16x32xf32, #tpu.memory_space<vmem>>, vector<16x32xf32>
      %c0_19 = arith.constant 0 : index
      %c0_20 = arith.constant 0 : index
      %43 = vector.load %arg10[%c0_19, %c0_20] : memref<16x1xf32, #tpu.memory_space<vmem>>, vector<16x1xf32>
      %cst_21 = arith.constant 1.000000e+00 : f32
      %44 = vector.broadcast %cst_21 : f32 to vector<16x1xf32>
      %45 = arith.maximumf %43, %44 : vector<16x1xf32>
      %46 = vector.broadcast %45 : vector<16x1xf32> to vector<16x32xf32>
      %47 = arith.divf %42, %46 : vector<16x32xf32>
      %c0_22 = arith.constant 0 : index
      %c0_23 = arith.constant 0 : index
      %48 = vector.load %arg5[%c0_22, %c0_23] : memref<16x1xi32, #tpu.memory_space<vmem>>, vector<16x1xi32>
      %cst_24 = arith.constant 0.000000e+00 : f32
      %49 = vector.broadcast %cst_24 : f32 to vector<16x32xf32>
      %c0_i32_25 = arith.constant 0 : i32
      %50 = vector.broadcast %c0_i32_25 : i32 to vector<16x1xi32>
      %51 = arith.cmpi eq, %48, %50 : vector<16x1xi32>
      %52 = arith.extui %51 : vector<16x1xi1> to vector<16x1xi32>
      %53 = arith.sitofp %52 : vector<16x1xi32> to vector<16x1xf32>
      %c0_26 = arith.constant 0 : index
      %c0_27 = arith.constant 0 : index
      %54 = vector.load %arg4[%c0_26, %c0_27] : memref<2x32xf32, #tpu.memory_space<vmem>>, vector<1x32xf32>
      %55 = vector.broadcast %53 : vector<16x1xf32> to vector<16x32xf32>
      %56 = vector.broadcast %54 : vector<1x32xf32> to vector<16x32xf32>
      %57 = arith.mulf %55, %56 : vector<16x32xf32>
      %58 = arith.addf %49, %57 : vector<16x32xf32>
      %c1_i32 = arith.constant 1 : i32
      %59 = vector.broadcast %c1_i32 : i32 to vector<16x1xi32>
      %60 = arith.cmpi eq, %48, %59 : vector<16x1xi32>
      %61 = arith.extui %60 : vector<16x1xi1> to vector<16x1xi32>
      %62 = arith.sitofp %61 : vector<16x1xi32> to vector<16x1xf32>
      %c1 = arith.constant 1 : index
      %c0_28 = arith.constant 0 : index
      %63 = vector.load %arg4[%c1, %c0_28] : memref<2x32xf32, #tpu.memory_space<vmem>>, vector<1x32xf32>
      %64 = vector.broadcast %62 : vector<16x1xf32> to vector<16x32xf32>
      %65 = vector.broadcast %63 : vector<1x32xf32> to vector<16x32xf32>
      %66 = arith.mulf %64, %65 : vector<16x32xf32>
      %67 = arith.addf %58, %66 : vector<16x32xf32>
      %c0_29 = arith.constant 0 : index
      %c0_30 = arith.constant 0 : index
      %68 = vector.load %arg6[%c0_29, %c0_30] : memref<160x32xf32, #tpu.memory_space<vmem>>, vector<96x32xf32>
      %c96 = arith.constant 96 : index
      %c0_31 = arith.constant 0 : index
      %69 = vector.load %arg6[%c96, %c0_31] : memref<160x32xf32, #tpu.memory_space<vmem>>, vector<32x32xf32>
      %c128 = arith.constant 128 : index
      %c0_32 = arith.constant 0 : index
      %70 = vector.load %arg6[%c128, %c0_32] : memref<160x32xf32, #tpu.memory_space<vmem>>, vector<32x32xf32>
      %c0_33 = arith.constant 0 : index
      %c0_34 = arith.constant 0 : index
      %71 = vector.load %arg7[%c0_33, %c0_34] : memref<9x32xf32, #tpu.memory_space<vmem>>, vector<1x32xf32>
      %c1_35 = arith.constant 1 : index
      %c0_36 = arith.constant 0 : index
      %72 = vector.load %arg7[%c1_35, %c0_36] : memref<9x32xf32, #tpu.memory_space<vmem>>, vector<1x32xf32>
      %c2 = arith.constant 2 : index
      %c0_37 = arith.constant 0 : index
      %73 = vector.load %arg7[%c2, %c0_37] : memref<9x32xf32, #tpu.memory_space<vmem>>, vector<1x32xf32>
      %c3 = arith.constant 3 : index
      %c0_38 = arith.constant 0 : index
      %74 = vector.load %arg7[%c3, %c0_38] : memref<9x32xf32, #tpu.memory_space<vmem>>, vector<1x32xf32>
      %c4 = arith.constant 4 : index
      %c0_39 = arith.constant 0 : index
      %75 = vector.load %arg7[%c4, %c0_39] : memref<9x32xf32, #tpu.memory_space<vmem>>, vector<1x32xf32>
      %c5 = arith.constant 5 : index
      %c0_40 = arith.constant 0 : index
      %76 = vector.load %arg7[%c5, %c0_40] : memref<9x32xf32, #tpu.memory_space<vmem>>, vector<1x32xf32>
      %c6 = arith.constant 6 : index
      %c0_41 = arith.constant 0 : index
      %77 = vector.load %arg7[%c6, %c0_41] : memref<9x32xf32, #tpu.memory_space<vmem>>, vector<1x32xf32>
      %c7 = arith.constant 7 : index
      %c0_42 = arith.constant 0 : index
      %78 = vector.load %arg7[%c7, %c0_42] : memref<9x32xf32, #tpu.memory_space<vmem>>, vector<1x32xf32>
      %c8 = arith.constant 8 : index
      %c0_43 = arith.constant 0 : index
      %79 = vector.load %arg7[%c8, %c0_43] : memref<9x32xf32, #tpu.memory_space<vmem>>, vector<1x32xf32>
      %c0_44 = arith.constant 0 : index
      %c0_45 = arith.constant 0 : index
      %80 = vector.load %arg1[%c0_44, %c0_45] : memref<16x32xf32, #tpu.memory_space<vmem>>, vector<16x32xf32>
      %81 = tpu.concatenate %80, %47, %67 in 1 : vector<16x32xf32>, vector<16x32xf32>, vector<16x32xf32> -> vector<16x96xf32>
      %cst_46 = arith.constant dense<0.000000e+00> : vector<16x32xf32>
      %82 = tpu.matmul %81, %68, %cst_46 {dimension_numbers = #tpu.dot_dimension_numbers<[1], [0], [0], [1], [0, 0, 1, 1], [], []>, precision = #tpu.contract_precision<fp32>} : vector<16x96xf32>, vector<96x32xf32>, vector<16x32xf32> -> vector<16x32xf32>
      %83 = vector.broadcast %71 : vector<1x32xf32> to vector<16x32xf32>
      %84 = arith.addf %82, %83 : vector<16x32xf32>
      %cst_47 = arith.constant 2.000000e+01 : f32
      %85 = vector.broadcast %cst_47 : f32 to vector<16x32xf32>
      %86 = arith.cmpf ogt, %84, %85 : vector<16x32xf32>
      %cst_48 = arith.constant 2.000000e+01 : f32
      %87 = vector.broadcast %cst_48 : f32 to vector<16x32xf32>
      %88 = arith.minimumf %84, %87 : vector<16x32xf32>
      %89 = math.exp %88 : vector<16x32xf32>
      %cst_49 = arith.constant 1.000000e+00 : f32
      %90 = vector.broadcast %cst_49 : f32 to vector<16x32xf32>
      %91 = arith.addf %90, %89 : vector<16x32xf32>
      %92 = math.log %91 : vector<16x32xf32>
      %93 = arith.select %86, %84, %92 : vector<16x32xi1>, vector<16x32xf32>
      %cst_50 = arith.constant dense<0.000000e+00> : vector<32xf32>
      %94 = vector.multi_reduction <add>, %93, %cst_50 [0] : vector<16x32xf32> to vector<32xf32>
      %95 = vector.shape_cast %94 : vector<32xf32> to vector<1x32xf32>
      %cst_51 = arith.constant 1.600000e+01 : f32
      %96 = vector.broadcast %cst_51 : f32 to vector<1x32xf32>
      %97 = arith.divf %95, %96 : vector<1x32xf32>
      %98 = vector.broadcast %97 : vector<1x32xf32> to vector<16x32xf32>
      %99 = arith.subf %93, %98 : vector<16x32xf32>
      %100 = arith.mulf %99, %99 : vector<16x32xf32>
      %cst_52 = arith.constant dense<0.000000e+00> : vector<32xf32>
      %101 = vector.multi_reduction <add>, %100, %cst_52 [0] : vector<16x32xf32> to vector<32xf32>
      %102 = vector.shape_cast %101 : vector<32xf32> to vector<1x32xf32>
      %cst_53 = arith.constant 1.600000e+01 : f32
      %103 = vector.broadcast %cst_53 : f32 to vector<1x32xf32>
      %104 = arith.divf %102, %103 : vector<1x32xf32>
      %105 = vector.broadcast %97 : vector<1x32xf32> to vector<16x32xf32>
      %106 = arith.subf %93, %105 : vector<16x32xf32>
      %107 = vector.broadcast %72 : vector<1x32xf32> to vector<16x32xf32>
      %108 = arith.mulf %107, %106 : vector<16x32xf32>
      %cst_54 = arith.constant 9.99999974E-6 : f32
      %109 = vector.broadcast %cst_54 : f32 to vector<1x32xf32>
      %110 = arith.addf %104, %109 : vector<1x32xf32>
      %111 = math.rsqrt %110 : vector<1x32xf32>
      %112 = vector.broadcast %111 : vector<1x32xf32> to vector<16x32xf32>
      %113 = arith.mulf %108, %112 : vector<16x32xf32>
      %114 = vector.broadcast %73 : vector<1x32xf32> to vector<16x32xf32>
      %115 = arith.addf %113, %114 : vector<16x32xf32>
      %cst_55 = arith.constant dense<0.000000e+00> : vector<16x32xf32>
      %116 = tpu.matmul %115, %69, %cst_55 {dimension_numbers = #tpu.dot_dimension_numbers<[1], [0], [0], [1], [0, 0, 1, 1], [], []>, precision = #tpu.contract_precision<fp32>} : vector<16x32xf32>, vector<32x32xf32>, vector<16x32xf32> -> vector<16x32xf32>
      %117 = vector.broadcast %74 : vector<1x32xf32> to vector<16x32xf32>
      %118 = arith.addf %116, %117 : vector<16x32xf32>
      %cst_56 = arith.constant 2.000000e+01 : f32
      %119 = vector.broadcast %cst_56 : f32 to vector<16x32xf32>
      %120 = arith.cmpf ogt, %118, %119 : vector<16x32xf32>
      %cst_57 = arith.constant 2.000000e+01 : f32
      %121 = vector.broadcast %cst_57 : f32 to vector<16x32xf32>
      %122 = arith.minimumf %118, %121 : vector<16x32xf32>
      %123 = math.exp %122 : vector<16x32xf32>
      %cst_58 = arith.constant 1.000000e+00 : f32
      %124 = vector.broadcast %cst_58 : f32 to vector<16x32xf32>
      %125 = arith.addf %124, %123 : vector<16x32xf32>
      %126 = math.log %125 : vector<16x32xf32>
      %127 = arith.select %120, %118, %126 : vector<16x32xi1>, vector<16x32xf32>
      %cst_59 = arith.constant dense<0.000000e+00> : vector<32xf32>
      %128 = vector.multi_reduction <add>, %127, %cst_59 [0] : vector<16x32xf32> to vector<32xf32>
      %129 = vector.shape_cast %128 : vector<32xf32> to vector<1x32xf32>
      %cst_60 = arith.constant 1.600000e+01 : f32
      %130 = vector.broadcast %cst_60 : f32 to vector<1x32xf32>
      %131 = arith.divf %129, %130 : vector<1x32xf32>
      %132 = vector.broadcast %131 : vector<1x32xf32> to vector<16x32xf32>
      %133 = arith.subf %127, %132 : vector<16x32xf32>
      %134 = arith.mulf %133, %133 : vector<16x32xf32>
      %cst_61 = arith.constant dense<0.000000e+00> : vector<32xf32>
      %135 = vector.multi_reduction <add>, %134, %cst_61 [0] : vector<16x32xf32> to vector<32xf32>
      %136 = vector.shape_cast %135 : vector<32xf32> to vector<1x32xf32>
      %cst_62 = arith.constant 1.600000e+01 : f32
      %137 = vector.broadcast %cst_62 : f32 to vector<1x32xf32>
      %138 = arith.divf %136, %137 : vector<1x32xf32>
      %139 = vector.broadcast %131 : vector<1x32xf32> to vector<16x32xf32>
      %140 = arith.subf %127, %139 : vector<16x32xf32>
      %141 = vector.broadcast %75 : vector<1x32xf32> to vector<16x32xf32>
      %142 = arith.mulf %141, %140 : vector<16x32xf32>
      %cst_63 = arith.constant 9.99999974E-6 : f32
      %143 = vector.broadcast %cst_63 : f32 to vector<1x32xf32>
      %144 = arith.addf %138, %143 : vector<1x32xf32>
      %145 = math.rsqrt %144 : vector<1x32xf32>
      %146 = vector.broadcast %145 : vector<1x32xf32> to vector<16x32xf32>
      %147 = arith.mulf %142, %146 : vector<16x32xf32>
      %148 = vector.broadcast %76 : vector<1x32xf32> to vector<16x32xf32>
      %149 = arith.addf %147, %148 : vector<16x32xf32>
      %cst_64 = arith.constant dense<0.000000e+00> : vector<16x32xf32>
      %150 = tpu.matmul %149, %70, %cst_64 {dimension_numbers = #tpu.dot_dimension_numbers<[1], [0], [0], [1], [0, 0, 1, 1], [], []>, precision = #tpu.contract_precision<fp32>} : vector<16x32xf32>, vector<32x32xf32>, vector<16x32xf32> -> vector<16x32xf32>
      %151 = vector.broadcast %77 : vector<1x32xf32> to vector<16x32xf32>
      %152 = arith.addf %150, %151 : vector<16x32xf32>
      %cst_65 = arith.constant dense<0.000000e+00> : vector<32xf32>
      %153 = vector.multi_reduction <add>, %152, %cst_65 [0] : vector<16x32xf32> to vector<32xf32>
      %154 = vector.shape_cast %153 : vector<32xf32> to vector<1x32xf32>
      %cst_66 = arith.constant 1.600000e+01 : f32
      %155 = vector.broadcast %cst_66 : f32 to vector<1x32xf32>
      %156 = arith.divf %154, %155 : vector<1x32xf32>
      %157 = vector.broadcast %156 : vector<1x32xf32> to vector<16x32xf32>
      %158 = arith.subf %152, %157 : vector<16x32xf32>
      %159 = arith.mulf %158, %158 : vector<16x32xf32>
      %cst_67 = arith.constant dense<0.000000e+00> : vector<32xf32>
      %160 = vector.multi_reduction <add>, %159, %cst_67 [0] : vector<16x32xf32> to vector<32xf32>
      %161 = vector.shape_cast %160 : vector<32xf32> to vector<1x32xf32>
      %cst_68 = arith.constant 1.600000e+01 : f32
      %162 = vector.broadcast %cst_68 : f32 to vector<1x32xf32>
      %163 = arith.divf %161, %162 : vector<1x32xf32>
      %164 = vector.broadcast %156 : vector<1x32xf32> to vector<16x32xf32>
      %165 = arith.subf %152, %164 : vector<16x32xf32>
      %166 = vector.broadcast %78 : vector<1x32xf32> to vector<16x32xf32>
      %167 = arith.mulf %166, %165 : vector<16x32xf32>
      %cst_69 = arith.constant 9.99999974E-6 : f32
      %168 = vector.broadcast %cst_69 : f32 to vector<1x32xf32>
      %169 = arith.addf %163, %168 : vector<1x32xf32>
      %170 = math.rsqrt %169 : vector<1x32xf32>
      %171 = vector.broadcast %170 : vector<1x32xf32> to vector<16x32xf32>
      %172 = arith.mulf %167, %171 : vector<16x32xf32>
      %173 = vector.broadcast %79 : vector<1x32xf32> to vector<16x32xf32>
      %174 = arith.addf %172, %173 : vector<16x32xf32>
      %c0_70 = arith.constant 0 : index
      %c0_71 = arith.constant 0 : index
      %175 = vector.load %arg8[%c0_70, %c0_71] : memref<16x32xf32, #tpu.memory_space<vmem>>, vector<16x32xf32>
      tpu.vector_store %arg8[%c0_70, %c0_71], %174 {strides = array<i32>} : memref<16x32xf32, #tpu.memory_space<vmem>>, vector<16x32xf32>,
    } else {
    }
    return
  }
  func.func @transform_0(%arg0: i32) -> (i32, i32) {
    %c0_i32 = arith.constant 0 : i32
    %c0_i32_0 = arith.constant 0 : i32
    %c0_i32_1 = arith.constant 0 : i32
    return %c0_i32, %c0_i32_0 : i32, i32
  }
  func.func @transform_1(%arg0: i32) -> (i32, i32) {
    %c0_i32 = arith.constant 0 : i32
    %c0_i32_0 = arith.constant 0 : i32
    return %c0_i32, %arg0 : i32, i32
  }
  func.func @transform_2(%arg0: i32) -> (i32, i32) {
    %c0_i32 = arith.constant 0 : i32
    %c0_i32_0 = arith.constant 0 : i32
    return %arg0, %c0_i32 : i32, i32
  }
  func.func @transform_3(%arg0: i32) -> (i32, i32) {
    %c0_i32 = arith.constant 0 : i32
    %c0_i32_0 = arith.constant 0 : i32
    %c0_i32_1 = arith.constant 0 : i32
    return %c0_i32, %c0_i32_0 : i32, i32
  }
  func.func @transform_4(%arg0: i32) -> (i32, i32) {
    %c0_i32 = arith.constant 0 : i32
    %c0_i32_0 = arith.constant 0 : i32
    %c0_i32_1 = arith.constant 0 : i32
    return %c0_i32, %c0_i32_0 : i32, i32
  }
  func.func @transform_5(%arg0: i32) -> (i32, i32) {
    %c0_i32 = arith.constant 0 : i32
    %c0_i32_0 = arith.constant 0 : i32
    %c0_i32_1 = arith.constant 0 : i32
    return %c0_i32, %c0_i32_0 : i32, i32
  }
  func.func @transform_6(%arg0: i32) -> (i32, i32) {
    %c0_i32 = arith.constant 0 : i32
    %c0_i32_0 = arith.constant 0 : i32
    %c0_i32_1 = arith.constant 0 : i32
    return %c0_i32, %c0_i32_0 : i32, i32
  }
  func.func @transform_7(%arg0: i32) -> (i32, i32) {
    %c0_i32 = arith.constant 0 : i32
    %c0_i32_0 = arith.constant 0 : i32
    %c0_i32_1 = arith.constant 0 : i32
    return %c0_i32, %c0_i32_0 : i32, i32
  }
}

</mosaic_0001>

<llo_original>
// kernel: tpu_custom_call.1
$region0: #{tpu_custom_call.1}
  #allocation0 [shape = 'u32[]', space=smem, size = 0x4, offset = 0x4, fixed_abs, tag = 'smem constant byte address 0x4 - core index']
  #allocation1 [shape = 'u32[144,128]{1,0:T(1,128)}', space=vmem, size = 0x12000, scoped, tag = 'internal scratch']
  #allocation2 [shape = 'f32[16,32]{1,0:T(8,128)}', space=vmem, size = 0x2000, scoped, tag = 'scratch operand']
  #allocation3 [shape = 'f32[16,1]{1,0:T(8,128)}', space=vmem, size = 0x2000, scoped, tag = 'scratch operand']
  %s0 = inlined_call_operand.vmem [shape: f32[16,32], index: 0, kind: input, shape index: {}]
  %s1 = inlined_call_operand.vmem [shape: s32[1,48], index: 1, kind: input, shape index: {}]
  %s2 = inlined_call_operand.vmem [shape: f32[48,32], index: 2, kind: input, shape index: {}]
  %s3 = inlined_call_operand.vmem [shape: f32[2,32], index: 3, kind: input, shape index: {}]
  %s4 = inlined_call_operand.vmem [shape: s32[16,1], index: 4, kind: input, shape index: {}]
  %s5 = inlined_call_operand.vmem [shape: f32[160,32], index: 5, kind: input, shape index: {}]
  %s6 = inlined_call_operand.vmem [shape: f32[9,32], index: 6, kind: input, shape index: {}]
  %s7 = inlined_call_operand.hbm [shape: f32[16,32], index: 7, kind: output, shape index: {}]
  %s8 = sld [smem:[#allocation0]]
  $region46: #{tpu_custom_call.1} parent=0
    _
  %s10 = ssub.s32 1, %s8
  %s11 = scalar_select 0, %s10, %s8
  $region1: #{tpu_custom_call.1} parent=0
    #allocation4 [shape = 'u8[8192]{0}', space=vmem, size = 0x2000, scoped, tag = 'output window, operand 0, single buffered']
    #allocation5 [shape = 's32[1]{0}', space=sflag, size = 0x4, scoped, tag = 'scoped memory for tpu_custom_call.1']
    %12 = vsyncpa [#allocation5], 0
    // Predicated region
    $region2: #{tpu_custom_call.1} parent=1 // pred_check
      _
    $region3: #{tpu_custom_call.1} parent=1 // pred_check_branch
      %14 = sbr.rel (0) target = $region5
    $region4: #{tpu_custom_call.1} parent=1 // pred_region
      _
    $region5: #{tpu_custom_call.1} parent=1 // pred_fallthru
      _
    // Predicated region
    $region6: #{tpu_custom_call.1} parent=1 // pred_check
      _
    $region7: #{tpu_custom_call.1} parent=1 // pred_check_branch
      %16 = sbr.rel (0) target = $region9
    $region8: #{tpu_custom_call.1} parent=1 // pred_region
      _
    $region9: #{tpu_custom_call.1} parent=1 // pred_fallthru
      _
    // Predicated region
    $region10: #{tpu_custom_call.1} parent=1 // pred_check
      _
    $region11: #{tpu_custom_call.1} parent=1 // pred_check_branch
      %18 = sbr.rel (0) target = $region13
    $region12: #{tpu_custom_call.1} parent=1 // pred_region
      _
    $region13: #{tpu_custom_call.1} parent=1 // pred_fallthru
      _
    // Predicated region
    $region14: #{tpu_custom_call.1} parent=1 // pred_check
      _
    $region15: #{tpu_custom_call.1} parent=1 // pred_check_branch
      %20 = sbr.rel (0) target = $region17
    $region16: #{tpu_custom_call.1} parent=1 // pred_region
      _
    $region17: #{tpu_custom_call.1} parent=1 // pred_fallthru
      _
    // Predicated region
    $region18: #{tpu_custom_call.1} parent=1 // pred_check
      _
    $region19: #{tpu_custom_call.1} parent=1 // pred_check_branch
      %22 = sbr.rel (0) target = $region21
    $region20: #{tpu_custom_call.1} parent=1 // pred_region
      _
    $region21: #{tpu_custom_call.1} parent=1 // pred_fallthru
      _
    // Predicated region
    $region22: #{tpu_custom_call.1} parent=1 // pred_check
      _
    $region23: #{tpu_custom_call.1} parent=1 // pred_check_branch
      %24 = sbr.rel (0) target = $region25
    $region24: #{tpu_custom_call.1} parent=1 // pred_region
      _
    $region25: #{tpu_custom_call.1} parent=1 // pred_fallthru
      _
    // Predicated region
    $region26: #{tpu_custom_call.1} parent=1 // pred_check
      _
    $region27: #{tpu_custom_call.1} parent=1 // pred_check_branch
      %26 = sbr.rel (0) target = $region29
    $region28: #{tpu_custom_call.1} parent=1 // pred_region
      _
    $region29: #{tpu_custom_call.1} parent=1 // pred_fallthru
      _
    %p28 = scmp.eq.s32.totalorder 0, 0
    // Predicated region
    $region30: #{tpu_custom_call.1} parent=1 // pred_check
      %p29 = pneg %p28
    $region31: #{tpu_custom_call.1} parent=1 // pred_check_branch
      %31 = sbr.rel (%p29) target = $region33
    $region32: #{tpu_custom_call.1} parent=1 // pred_region
      %vm32 = vcmask 261120
      %33 = vst.msk [vmem:[#allocation2] sm:$0xff] %vm32, 0.0
      %34 = vst.msk [vmem:[#allocation2 + $0x8] sm:$0xff] %vm32, 0.0
      %vm35 = vcmask 7168
      %36 = vst.msk [vmem:[#allocation3] sm:$0xff] %vm35, 0.0
      %37 = vst.msk [vmem:[#allocation3 + $0x8] sm:$0xff] %vm35, 0.0
    $region33: #{tpu_custom_call.1} parent=1 // pred_fallthru
      _
    %v38 = vld [vmem:[%s2] sm:$0xff]
    %v39 = vld [vmem:[%s2 + $0x8] sm:$0xff]
    %v40 = vld [vmem:[%s2 + $0x10] sm:$0xff]
    %v41 = vld [vmem:[%s2 + $0x18] sm:$0xff]
    %v42 = vld [vmem:[%s2 + $0x20] sm:$0xff]
    %v43 = vld [vmem:[%s2 + $0x28] sm:$0xff]
    %v44 = vld [vmem:[%s2 + $0x30] sm:$0xff]
    %v45 = vld [vmem:[%s2 + $0x38] sm:$0xff]
    %v46 = vld [vmem:[%s2 + $0x40] sm:$0xff]
    %v47 = vld [vmem:[%s2 + $0x48] sm:$0xff]
    %v48 = vld [vmem:[%s2 + $0x50] sm:$0xff]
    %v49 = vld [vmem:[%s2 + $0x58] sm:$0xff]
    %v50 = vld [vmem:[%s2 + $0x60] sm:$0xff]
    %v51 = vld [vmem:[%s2 + $0x68] sm:$0xff]
    %v52 = vld [vmem:[%s2 + $0x70] sm:$0xff]
    %v53 = vld [vmem:[%s2 + $0x78] sm:$0xff]
    %v54 = vlaneseq
    %v55 = vshrl.u32 %v54, 7
    %v56 = vadd.s32 %v55, 8
    %v57 = vadd.s32 %v55, 16
    %v58 = vadd.s32 %v55, 24
    %v59 = vadd.s32 %v55, 32
    %v60 = vadd.s32 %v55, 40
    %v61 = vadd.s32 %v55, 48
    %v62 = vadd.s32 %v55, 56
    %v63 = vadd.s32 %v55, 64
    %v64 = vadd.s32 %v55, 72
    %v65 = vadd.s32 %v55, 80
    %v66 = vadd.s32 %v55, 88
    %v67 = vadd.s32 %v55, 96
    %v68 = vadd.s32 %v55, 104
    %v69 = vadd.s32 %v55, 112
    %v70 = vadd.s32 %v55, 120
    %s71 = smul.u32 0, 128
    %v72 = vstv %s71
    %v73 = vadd.s32 %v55, %v72
    %v74 = vadd.s32 %v56, %v72
    %v75 = vadd.s32 %v57, %v72
    %v76 = vadd.s32 %v58, %v72
    %v77 = vadd.s32 %v59, %v72
    %v78 = vadd.s32 %v60, %v72
    %v79 = vadd.s32 %v61, %v72
    %v80 = vadd.s32 %v62, %v72
    %v81 = vadd.s32 %v63, %v72
    %v82 = vadd.s32 %v64, %v72
    %v83 = vadd.s32 %v65, %v72
    %v84 = vadd.s32 %v66, %v72
    %v85 = vadd.s32 %v67, %v72
    %v86 = vadd.s32 %v68, %v72
    %v87 = vadd.s32 %v69, %v72
    %v88 = vadd.s32 %v70, %v72
    %vm89 = vcmp.lt.s32.totalorder %v73, 48
    %vm90 = vcmp.lt.s32.totalorder %v74, 48
    %vm91 = vcmp.lt.s32.totalorder %v75, 48
    %vm92 = vcmp.lt.s32.totalorder %v76, 48
    %vm93 = vcmp.lt.s32.totalorder %v77, 48
    %vm94 = vcmp.lt.s32.totalorder %v78, 48
    %vm95 = vcmp.lt.s32.totalorder %v79, 48
    %vm96 = vcmp.lt.s32.totalorder %v80, 48
    %vm97 = vcmp.lt.s32.totalorder %v81, 48
    %vm98 = vcmp.lt.s32.totalorder %v82, 48
    %vm99 = vcmp.lt.s32.totalorder %v83, 48
    %vm100 = vcmp.lt.s32.totalorder %v84, 48
    %vm101 = vcmp.lt.s32.totalorder %v85, 48
    %vm102 = vcmp.lt.s32.totalorder %v86, 48
    %vm103 = vcmp.lt.s32.totalorder %v87, 48
    %vm104 = vcmp.lt.s32.totalorder %v88, 48
    %v105 = vsel %vm89, 1, 0
    %v106 = vsel %vm90, 1, 0
    %v107 = vsel %vm91, 1, 0
    %v108 = vsel %vm92, 1, 0
    %v109 = vsel %vm93, 1, 0
    %v110 = vsel %vm94, 1, 0
    %v111 = vsel %vm95, 1, 0
    %v112 = vsel %vm96, 1, 0
    %v113 = vsel %vm97, 1, 0
    %v114 = vsel %vm98, 1, 0
    %v115 = vsel %vm99, 1, 0
    %v116 = vsel %vm100, 1, 0
    %v117 = vsel %vm101, 1, 0
    %v118 = vsel %vm102, 1, 0
    %v119 = vsel %vm103, 1, 0
    %v120 = vsel %vm104, 1, 0
    %vm121 = vcmp.eq.s32.totalorder %v105, 1
    %vm122 = vcmp.eq.s32.totalorder %v106, 1
    %vm123 = vcmp.eq.s32.totalorder %v107, 1
    %vm124 = vcmp.eq.s32.totalorder %v108, 1
    %vm125 = vcmp.eq.s32.totalorder %v109, 1
    %vm126 = vcmp.eq.s32.totalorder %v110, 1
    %vm127 = vcmp.eq.s32.totalorder %v111, 1
    %vm128 = vcmp.eq.s32.totalorder %v112, 1
    %vm129 = vcmp.eq.s32.totalorder %v113, 1
    %vm130 = vcmp.eq.s32.totalorder %v114, 1
    %vm131 = vcmp.eq.s32.totalorder %v115, 1
    %vm132 = vcmp.eq.s32.totalorder %v116, 1
    %vm133 = vcmp.eq.s32.totalorder %v117, 1
    %vm134 = vcmp.eq.s32.totalorder %v118, 1
    %vm135 = vcmp.eq.s32.totalorder %v119, 1
    %vm136 = vcmp.eq.s32.totalorder %v120, 1
    %v137 = vsel %vm121, %v38, 0.0
    %v138 = vsel %vm122, %v39, 0.0
    %v139 = vsel %vm123, %v40, 0.0
    %v140 = vsel %vm124, %v41, 0.0
    %v141 = vsel %vm125, %v42, 0.0
    %v142 = vsel %vm126, %v43, 0.0
    %v143 = vsel %vm127, %v44, 0.0
    %v144 = vsel %vm128, %v45, 0.0
    %v145 = vsel %vm129, %v46, 0.0
    %v146 = vsel %vm130, %v47, 0.0
    %v147 = vsel %vm131, %v48, 0.0
    %v148 = vsel %vm132, %v49, 0.0
    %v149 = vsel %vm133, %v50, 0.0
    %v150 = vsel %vm134, %v51, 0.0
    %v151 = vsel %vm135, %v52, 0.0
    %v152 = vsel %vm136, %v53, 0.0
    %v153 = vcvt.s32.f32 %v105
    %v154 = vcvt.s32.f32 %v106
    %v155 = vcvt.s32.f32 %v107
    %v156 = vcvt.s32.f32 %v108
    %v157 = vcvt.s32.f32 %v109
    %v158 = vcvt.s32.f32 %v110
    %v159 = vcvt.s32.f32 %v111
    %v160 = vcvt.s32.f32 %v112
    %v161 = vcvt.s32.f32 %v113
    %v162 = vcvt.s32.f32 %v114
    %v163 = vcvt.s32.f32 %v115
    %v164 = vcvt.s32.f32 %v116
    %v165 = vcvt.s32.f32 %v117
    %v166 = vcvt.s32.f32 %v118
    %v167 = vcvt.s32.f32 %v119
    %v168 = vcvt.s32.f32 %v120
    %v169 = vpack.c.bf16 %v154, %v153
    %v170 = vpack.c.bf16 %v156, %v155
    %v171 = vpack.c.bf16 %v158, %v157
    %v172 = vpack.c.bf16 %v160, %v159
    %v173 = vpack.c.bf16 %v162, %v161
    %v174 = vpack.c.bf16 %v164, %v163
    %v175 = vpack.c.bf16 %v166, %v165
    %v176 = vpack.c.bf16 %v168, %v167
    %v177 = vld [vmem:[%s1] sm:$0x1]
    %v178 = vlaneseq
    %v179 = vshrl.u32 %v178, 7
    %v180 = vsub.s32 0, %v179
    %v181 = vrot.slane %v177, %v180
    %vm182 = vcmp.eq.s32.totalorder %v55, %v181
    %vm183 = vcmp.eq.s32.totalorder %v56, %v181
    %v184 = vsel %vm182, 1, 0
    %v185 = vsel %vm183, 1, 0
    %v186 = vcvt.s32.f32 %v184
    %v187 = vcvt.s32.f32 %v185
    %v188 = vpack.c.bf16 %v187, %v186
    %v189 = vpack.c.bf16 %v138, %v137
    %v190 = vpack.c.bf16 %v140, %v139
    %v191 = vpack.c.bf16 %v142, %v141
    %v192 = vpack.c.bf16 %v144, %v143
    %v193 = vpack.c.bf16 %v146, %v145
    %v194 = vpack.c.bf16 %v148, %v147
    %v195 = vpack.c.bf16 %v150, %v149
    %v196 = vpack.c.bf16 %v152, %v151
    %v197 = vunpack.c.l.bf16 %v189
    %v198 = vunpack.c.h.bf16 %v189
    %v199 = vunpack.c.l.bf16 %v190
    %v200 = vunpack.c.h.bf16 %v190
    %v201 = vunpack.c.l.bf16 %v191
    %v202 = vunpack.c.h.bf16 %v191
    %v203 = vunpack.c.l.bf16 %v192
    %v204 = vunpack.c.h.bf16 %v192
    %v205 = vunpack.c.l.bf16 %v193
    %v206 = vunpack.c.h.bf16 %v193
    %v207 = vunpack.c.l.bf16 %v194
    %v208 = vunpack.c.h.bf16 %v194
    %v209 = vunpack.c.l.bf16 %v195
    %v210 = vunpack.c.h.bf16 %v195
    %v211 = vunpack.c.l.bf16 %v196
    %v212 = vunpack.c.h.bf16 %v196
    %v213 = vsub.f32 %v137, %v197
    %v214 = vsub.f32 %v138, %v198
    %v215 = vsub.f32 %v139, %v199
    %v216 = vsub.f32 %v140, %v200
    %v217 = vsub.f32 %v141, %v201
    %v218 = vsub.f32 %v142, %v202
    %v219 = vsub.f32 %v143, %v203
    %v220 = vsub.f32 %v144, %v204
    %v221 = vsub.f32 %v145, %v205
    %v222 = vsub.f32 %v146, %v206
    %v223 = vsub.f32 %v147, %v207
    %v224 = vsub.f32 %v148, %v208
    %v225 = vsub.f32 %v149, %v209
    %v226 = vsub.f32 %v150, %v210
    %v227 = vsub.f32 %v151, %v211
    %v228 = vsub.f32 %v152, %v212
    %v229 = vpack.c.bf16 %v214, %v213
    %v230 = vpack.c.bf16 %v216, %v215
    %v231 = vpack.c.bf16 %v218, %v217
    %v232 = vpack.c.bf16 %v220, %v219
    %v233 = vpack.c.bf16 %v222, %v221
    %v234 = vpack.c.bf16 %v224, %v223
    %v235 = vpack.c.bf16 %v226, %v225
    %v236 = vpack.c.bf16 %v228, %v227
    %v237 = vld [vmem:[#allocation2] sm:$0xff]
    %v238 = vld [vmem:[#allocation2 + $0x8] sm:$0xff]
    %239 = vmatprep.subr.bf16.mxu0 0
    %240 = vmatpush1.bf16.msra.mxu0 %v229
    %241 = vmatprep.subr.bf16.mxu0 0
    %242 = vmatpush1.bf16.msra.mxu0 %v230
    %243 = vmatprep.subr.bf16.mxu0 0
    %244 = vmatpush1.bf16.msra.mxu0 %v231
    %245 = vmatprep.subr.bf16.mxu0 0
    %246 = vmatpush1.bf16.msra.mxu0 %v232
    %247 = vmatprep.subr.bf16.mxu0 0
    %248 = vmatpush1.bf16.msra.mxu0 %v233
    %249 = vmatprep.subr.bf16.mxu0 0
    %250 = vmatpush1.bf16.msra.mxu0 %v234
    %251 = vmatprep.subr.bf16.mxu0 0
    %252 = vmatpush1.bf16.msra.mxu0 %v235
    %253 = vmatprep.subr.bf16.mxu0 0
    %254 = vmatpush1.bf16.msra.mxu0 %v236
    %255 = vmatprep.subr.bf16.mxu0 0
    %256 = vmatpush1.bf16.msra.mxu0 0
    %257 = vmatprep.subr.bf16.mxu0 0
    %258 = vmatpush1.bf16.msra.mxu0 0
    %259 = vmatprep.subr.bf16.mxu0 0
    %260 = vmatpush1.bf16.msra.mxu0 0
    %261 = vmatprep.subr.bf16.mxu0 0
    %262 = vmatpush1.bf16.msra.mxu0 0
    %263 = vmatprep.subr.bf16.mxu0 0
    %264 = vmatpush1.bf16.msra.mxu0 0
    %265 = vmatprep.subr.bf16.mxu0 0
    %266 = vmatpush1.bf16.msra.mxu0 0
    %267 = vmatprep.subr.bf16.mxu0 0
    %268 = vmatpush1.bf16.msra.mxu0 0
    %269 = vmatprep.subr.bf16.mxu0 0
    %270 = vmatpush1.bf16.msra.mxu0 0
    %271 = vmatprep.mubr.bf16.mxu0 0
    %272 = vmatmul.mubr.bf16.gmra.mrb[0].mxu0 %v188
    %v273 = vpop.f32.mrb[0].mxu0
    %v274 = vadd.f32 0.0, %v273
    %v275 = vpop.f32.mrb[0].mxu0
    %v276 = vpop.f32.mrb[0].mxu0
    %v277 = vadd.f32 0.0, %v276
    %v278 = vpop.f32.mrb[0].mxu0
    %279 = vdwg.mxu0
    %280 = vmatprep.subr.bf16.mxu0 0
    %281 = vmatpush1.bf16.msra.mxu0 %v189
    %282 = vmatprep.subr.bf16.mxu0 0
    %283 = vmatpush1.bf16.msra.mxu0 %v190
    %284 = vmatprep.subr.bf16.mxu0 0
    %285 = vmatpush1.bf16.msra.mxu0 %v191
    %286 = vmatprep.subr.bf16.mxu0 0
    %287 = vmatpush1.bf16.msra.mxu0 %v192
    %288 = vmatprep.subr.bf16.mxu0 0
    %289 = vmatpush1.bf16.msra.mxu0 %v193
    %290 = vmatprep.subr.bf16.mxu0 0
    %291 = vmatpush1.bf16.msra.mxu0 %v194
    %292 = vmatprep.subr.bf16.mxu0 0
    %293 = vmatpush1.bf16.msra.mxu0 %v195
    %294 = vmatprep.subr.bf16.mxu0 0
    %295 = vmatpush1.bf16.msra.mxu0 %v196
    %296 = vmatprep.subr.bf16.mxu0 0
    %297 = vmatpush1.bf16.msra.mxu0 0
    %298 = vmatprep.subr.bf16.mxu0 0
    %299 = vmatpush1.bf16.msra.mxu0 0
    %300 = vmatprep.subr.bf16.mxu0 0
    %301 = vmatpush1.bf16.msra.mxu0 0
    %302 = vmatprep.subr.bf16.mxu0 0
    %303 = vmatpush1.bf16.msra.mxu0 0
    %304 = vmatprep.subr.bf16.mxu0 0
    %305 = vmatpush1.bf16.msra.mxu0 0
    %306 = vmatprep.subr.bf16.mxu0 0
    %307 = vmatpush1.bf16.msra.mxu0 0
    %308 = vmatprep.subr.bf16.mxu0 0
    %309 = vmatpush1.bf16.msra.mxu0 0
    %310 = vmatprep.subr.bf16.mxu0 0
    %311 = vmatpush1.bf16.msra.mxu0 0
    %312 = vmatprep.mubr.bf16.mxu0 0
    %313 = vmatmul.mubr.bf16.gmra.mrb[0].mxu0 %v188
    %v314 = vpop.f32.mrb[0].mxu0
    %v315 = vadd.f32 %v274, %v314
    %v316 = vpop.f32.mrb[0].mxu0
    %v317 = vpop.f32.mrb[0].mxu0
    %v318 = vadd.f32 %v277, %v317
    %v319 = vpop.f32.mrb[0].mxu0
    %320 = vdwg.mxu0
    %v321 = vadd.f32 %v237, %v315
    %v322 = vadd.f32 %v238, %v318
    %vm323 = vcmask 261120
    %324 = vst.msk [vmem:[#allocation2] sm:$0xff] %vm323, %v321
    %325 = vst.msk [vmem:[#allocation2 + $0x8] sm:$0xff] %vm323, %v322
    %v326 = vld [vmem:[#allocation3] sm:$0xff]
    %v327 = vld [vmem:[#allocation3 + $0x8] sm:$0xff]
    %328 = vmatprep.subr.bf16.mxu0 0
    %329 = vmatpush1.bf16.msra.mxu0 %v169
    %330 = vmatprep.subr.bf16.mxu0 0
    %331 = vmatpush1.bf16.msra.mxu0 %v170
    %332 = vmatprep.subr.bf16.mxu0 0
    %333 = vmatpush1.bf16.msra.mxu0 %v171
    %334 = vmatprep.subr.bf16.mxu0 0
    %335 = vmatpush1.bf16.msra.mxu0 %v172
    %336 = vmatprep.subr.bf16.mxu0 0
    %337 = vmatpush1.bf16.msra.mxu0 %v173
    %338 = vmatprep.subr.bf16.mxu0 0
    %339 = vmatpush1.bf16.msra.mxu0 %v174
    %340 = vmatprep.subr.bf16.mxu0 0
    %341 = vmatpush1.bf16.msra.mxu0 %v175
    %342 = vmatprep.subr.bf16.mxu0 0
    %343 = vmatpush1.bf16.msra.mxu0 %v176
    %344 = vmatprep.subr.bf16.mxu0 0
    %345 = vmatpush1.bf16.msra.mxu0 0
    %346 = vmatprep.subr.bf16.mxu0 0
    %347 = vmatpush1.bf16.msra.mxu0 0
    %348 = vmatprep.subr.bf16.mxu0 0
    %349 = vmatpush1.bf16.msra.mxu0 0
    %350 = vmatprep.subr.bf16.mxu0 0
    %351 = vmatpush1.bf16.msra.mxu0 0
    %352 = vmatprep.subr.bf16.mxu0 0
    %353 = vmatpush1.bf16.msra.mxu0 0
    %354 = vmatprep.subr.bf16.mxu0 0
    %355 = vmatpush1.bf16.msra.mxu0 0
    %356 = vmatprep.subr.bf16.mxu0 0
    %357 = vmatpush1.bf16.msra.mxu0 0
    %358 = vmatprep.subr.bf16.mxu0 0
    %359 = vmatpush1.bf16.msra.mxu0 0
    %360 = vmatprep.mubr.bf16.mxu0 0
    %361 = vmatmul.mubr.bf16.gmra.mrb[0].mxu0 %v188
    %v362 = vpop.f32.mrb[0].mxu0
    %v363 = vadd.f32 0.0, %v362
    %v364 = vpop.f32.mrb[0].mxu0
    %v365 = vpop.f32.mrb[0].mxu0
    %v366 = vadd.f32 0.0, %v365
    %v367 = vpop.f32.mrb[0].mxu0
    %368 = vdwg.mxu0
    %v369 = vadd.f32 %v326, %v363
    %v370 = vadd.f32 %v327, %v366
    %vm371 = vcmask 7168
    %372 = vst.msk [vmem:[#allocation3] sm:$0xff] %vm371, %v369
    %373 = vst.msk [vmem:[#allocation3 + $0x8] sm:$0xff] %vm371, %v370
    // Predicated region
    $region34: #{tpu_custom_call.1} parent=1 // pred_check
      %p374 = pneg %p28
    $region35: #{tpu_custom_call.1} parent=1 // pred_check_branch
      %376 = sbr.rel (%p374) target = $region37
    $region36: #{tpu_custom_call.1} parent=1 // pred_region
      %v377 = vld [vmem:[#allocation2] sm:$0xff]
      %v378 = vld [vmem:[#allocation2 + $0x8] sm:$0xff]
      %v379 = vld [vmem:[#allocation3] sm:$0xff]
      %v380 = vld [vmem:[#allocation3 + $0x8] sm:$0xff]
      %v381 = vmax.f32 %v379, 1.0
      %v382 = vmax.f32 %v380, 1.0
      %384 = vset.pattern.permute.xlu0 0
      %385 = vperm.xlu0 %384, %v381
      %v386 = vpop.permute.xlu0 %385
      %389 = vset.pattern.permute.xlu0 0
      %390 = vperm.xlu0 %389, %v382
      %v391 = vpop.permute.xlu0 %390
      %v393 = vrcp.pop %v386
      %v394 = vmul.f32 %v377, %v393
      %v395 = vrcp.pop %v391
      %v396 = vmul.f32 %v378, %v395
      %v397 = vld [vmem:[%s4] sm:$0xff]
      %v398 = vld [vmem:[%s4 + $0x8] sm:$0xff]
      %vm399 = vcmp.eq.s32.totalorder %v397, 0
      %vm400 = vcmp.eq.s32.totalorder %v398, 0
      %v401 = vsel %vm399, 1, 0
      %v402 = vsel %vm400, 1, 0
      %v403 = vcvt.s32.f32 %v401
      %v404 = vcvt.s32.f32 %v402
      %v405 = vld [vmem:[%s3] sm:$0x1]
      %407 = vset.pattern.permute.xlu0 0
      %408 = vperm.xlu0 %407, %v403
      %v409 = vpop.permute.xlu0 %408
      %412 = vset.pattern.permute.xlu0 0
      %413 = vperm.xlu0 %412, %v404
      %v414 = vpop.permute.xlu0 %413
      %v416 = vlaneseq
      %v417 = vshrl.u32 %v416, 7
      %v418 = vsub.s32 0, %v417
      %v419 = vrot.slane %v405, %v418
      %v420 = vmul.f32 %v409, %v419
      %v421 = vmul.f32 %v414, %v419
      %v422 = vadd.f32 %v420, 0.0
      %v423 = vadd.f32 %v421, 0.0
      %vm424 = vcmp.eq.s32.totalorder %v397, 1
      %vm425 = vcmp.eq.s32.totalorder %v398, 1
      %v426 = vsel %vm424, 1, 0
      %v427 = vsel %vm425, 1, 0
      %v428 = vcvt.s32.f32 %v426
      %v429 = vcvt.s32.f32 %v427
      %v430 = vld [vmem:[%s3 + $0x1] sm:$0x1]
      %432 = vset.pattern.permute.xlu0 0
      %433 = vperm.xlu0 %432, %v428
      %v434 = vpop.permute.xlu0 %433
      %437 = vset.pattern.permute.xlu0 0
      %438 = vperm.xlu0 %437, %v429
      %v439 = vpop.permute.xlu0 %438
      %v441 = vlaneseq
      %v442 = vshrl.u32 %v441, 7
      %v443 = vsub.s32 0, %v442
      %v444 = vrot.slane %v430, %v443
      %v445 = vmul.f32 %v434, %v444
      %v446 = vmul.f32 %v439, %v444
      %v447 = vadd.f32 %v422, %v445
      %v448 = vadd.f32 %v423, %v446
      %v449 = vld [vmem:[%s5] sm:$0xff]
      %v450 = vld [vmem:[%s5 + $0x8] sm:$0xff]
      %v451 = vld [vmem:[%s5 + $0x10] sm:$0xff]
      %v452 = vld [vmem:[%s5 + $0x18] sm:$0xff]
      %v453 = vld [vmem:[%s5 + $0x20] sm:$0xff]
      %v454 = vld [vmem:[%s5 + $0x28] sm:$0xff]
      %v455 = vld [vmem:[%s5 + $0x30] sm:$0xff]
      %v456 = vld [vmem:[%s5 + $0x38] sm:$0xff]
      %v457 = vld [vmem:[%s5 + $0x40] sm:$0xff]
      %v458 = vld [vmem:[%s5 + $0x48] sm:$0xff]
      %v459 = vld [vmem:[%s5 + $0x50] sm:$0xff]
      %v460 = vld [vmem:[%s5 + $0x58] sm:$0xff]
      %v461 = vld [vmem:[%s5 + $0x60] sm:$0xff]
      %v462 = vld [vmem:[%s5 + $0x68] sm:$0xff]
      %v463 = vld [vmem:[%s5 + $0x70] sm:$0xff]
      %v464 = vld [vmem:[%s5 + $0x78] sm:$0xff]
      %v465 = vld [vmem:[%s5 + $0x80] sm:$0xff]
      %v466 = vld [vmem:[%s5 + $0x88] sm:$0xff]
      %v467 = vld [vmem:[%s5 + $0x90] sm:$0xff]
      %v468 = vld [vmem:[%s5 + $0x98] sm:$0xff]
      %v469 = vld [vmem:[%s6] sm:$0x1]
      %v470 = vld [vmem:[%s6 + $0x1] sm:$0x1]
      %v471 = vld [vmem:[%s6 + $0x2] sm:$0x1]
      %v472 = vld [vmem:[%s6 + $0x3] sm:$0x1]
      %v473 = vld [vmem:[%s6 + $0x4] sm:$0x1]
      %v474 = vld [vmem:[%s6 + $0x5] sm:$0x1]
      %v475 = vld [vmem:[%s6 + $0x6] sm:$0x1]
      %v476 = vld [vmem:[%s6 + $0x7] sm:$0x1]
      %v477 = vld [vmem:[%s6 + $0x8] sm:$0x1]
      %v478 = vld [vmem:[%s0] sm:$0xff]
      %v479 = vld [vmem:[%s0 + $0x8] sm:$0xff]
      %482 = vrot.lane.b32.xlu0 %v394, 32
      %v483 = vpop.permute.xlu0 %482
      %484 = vrot.lane.b32.xlu0 %v396, 32
      %v485 = vpop.permute.xlu0 %484
      %490 = vrot.lane.b32.xlu0 %v447, 64
      %v491 = vpop.permute.xlu0 %490
      %492 = vrot.lane.b32.xlu0 %v448, 64
      %v493 = vpop.permute.xlu0 %492
      %v496 = vsel %vm323, %v478, %v483
      %v497 = vsel %vm323, %v479, %v485
      %vm498 = vcmask 523264
      %v499 = vsel %vm498, %v496, %v491
      %v500 = vsel %vm498, %v497, %v493
      %v501 = vlaneseq
      %v502 = vshrl.u32 %v501, 7
      %v503 = vsub.s32 0, %v502
      %v504 = vrot.slane %v469, %v503
      %vm505 = vcmask 785408
      %v507 = vsel %vm505, %v499, 0
      %v510 = vsel %vm505, %v500, 0
      %512 = vmatprep.subr.mxu0 0.0
      %v513 = vand.u32 %v449, 4294901760
      %514 = vmatpush1.msra.mxu0 %v513
      %515 = vmatprep.subr.mxu0 0.0
      %v516 = vand.u32 %v450, 4294901760
      %517 = vmatpush1.msra.mxu0 %v516
      %518 = vmatprep.subr.mxu0 0.0
      %v519 = vand.u32 %v451, 4294901760
      %520 = vmatpush1.msra.mxu0 %v519
      %521 = vmatprep.subr.mxu0 0.0
      %v522 = vand.u32 %v452, 4294901760
      %523 = vmatpush1.msra.mxu0 %v522
      %524 = vmatprep.subr.mxu0 0.0
      %v525 = vand.u32 %v453, 4294901760
      %526 = vmatpush1.msra.mxu0 %v525
      %527 = vmatprep.subr.mxu0 0.0
      %v528 = vand.u32 %v454, 4294901760
      %529 = vmatpush1.msra.mxu0 %v528
      %530 = vmatprep.subr.mxu0 0.0
      %v531 = vand.u32 %v455, 4294901760
      %532 = vmatpush1.msra.mxu0 %v531
      %533 = vmatprep.subr.mxu0 0.0
      %v534 = vand.u32 %v456, 4294901760
      %535 = vmatpush1.msra.mxu0 %v534
      %536 = vmatprep.subr.mxu0 0.0
      %v537 = vand.u32 %v457, 4294901760
      %538 = vmatpush1.msra.mxu0 %v537
      %539 = vmatprep.subr.mxu0 0.0
      %v540 = vand.u32 %v458, 4294901760
      %541 = vmatpush1.msra.mxu0 %v540
      %542 = vmatprep.subr.mxu0 0.0
      %v543 = vand.u32 %v459, 4294901760
      %544 = vmatpush1.msra.mxu0 %v543
      %545 = vmatprep.subr.mxu0 0.0
      %v546 = vand.u32 %v460, 4294901760
      %547 = vmatpush1.msra.mxu0 %v546
      %548 = vmatprep.subr.mxu0 0.0
      %549 = vmatpush1.msra.mxu0 0.0
      %550 = vmatprep.subr.mxu0 0.0
      %551 = vmatpush1.msra.mxu0 0.0
      %552 = vmatprep.subr.mxu0 0.0
      %553 = vmatpush1.msra.mxu0 0.0
      %554 = vmatprep.subr.mxu0 0.0
      %555 = vmatpush1.msra.mxu0 0.0
      %556 = vmatprep.subr.mxu0 0.0
      %557 = vmatpush1.msra.mxu0 0.0
      %558 = vmatprep.subr.mxu0 0.0
      %559 = vmatpush1.msra.mxu0 0.0
      %560 = vmatprep.subr.mxu0 0.0
      %561 = vmatpush1.msra.mxu0 0.0
      %562 = vmatprep.subr.mxu0 0.0
      %563 = vmatpush1.msra.mxu0 0.0
      %564 = vmatprep.subr.mxu0 0.0
      %565 = vmatpush1.msra.mxu0 0.0
      %566 = vmatprep.subr.mxu0 0.0
      %567 = vmatpush1.msra.mxu0 0.0
      %568 = vmatprep.subr.mxu0 0.0
      %569 = vmatpush1.msra.mxu0 0.0
      %570 = vmatprep.subr.mxu0 0.0
      %571 = vmatpush1.msra.mxu0 0.0
      %572 = vmatprep.subr.mxu0 0.0
      %573 = vmatpush1.msra.mxu0 0.0
      %574 = vmatprep.subr.mxu0 0.0
      %575 = vmatpush1.msra.mxu0 0.0
      %576 = vmatprep.subr.mxu0 0.0
      %577 = vmatpush1.msra.mxu0 0.0
      %578 = vmatprep.subr.mxu0 0.0
      %579 = vmatpush1.msra.mxu0 0.0
      %580 = vmatprep.subr.mxu0 0.0
      %581 = vmatpush1.msra.mxu0 0.0
      %582 = vmatprep.subr.mxu0 0.0
      %583 = vmatpush1.msra.mxu0 0.0
      %584 = vmatprep.subr.mxu0 0.0
      %585 = vmatpush1.msra.mxu0 0.0
      %586 = vmatprep.subr.mxu0 0.0
      %587 = vmatpush1.msra.mxu0 0.0
      %588 = vmatprep.mubr.f32.mxu0 0.0
      %v589 = vand.u32 %v507, 4294901760
      %v590 = vsub.f32 %v507, %v589
      %v591 = vand.u32 %v590, 4294901760
      %v592 = vsub.f32 %v590, %v591
      %v593 = vand.u32 %v592, 4294901760
      %594 = vmatmul.mubr.f32.gmra.mrb[0].mxu0 %v593
      %v595 = vpop.f32.mrb[0].mxu0
      %v596 = vadd.f32 %v504, %v595
      %v597 = vpop.f32.mrb[0].mxu0
      %598 = vmatprep.mubr.f32.mxu0 0.0
      %v599 = vand.u32 %v510, 4294901760
      %v600 = vsub.f32 %v510, %v599
      %v601 = vand.u32 %v600, 4294901760
      %v602 = vsub.f32 %v600, %v601
      %v603 = vand.u32 %v602, 4294901760
      %604 = vmatmul.mubr.f32.gmra.mrb[0].mxu0 %v603
      %v605 = vpop.f32.mrb[0].mxu0
      %v606 = vadd.f32 %v504, %v605
      %v607 = vpop.f32.mrb[0].mxu0
      %608 = vdwg.mxu0
      %609 = vmatprep.subr.mxu0 0.0
      %v610 = vand.u32 %v449, 4294901760
      %v611 = vsub.f32 %v449, %v610
      %v612 = vand.u32 %v611, 4294901760
      %v613 = vsub.f32 %v611, %v612
      %v614 = vand.u32 %v613, 4294901760
      %615 = vmatpush1.msra.mxu0 %v614
      %616 = vmatprep.subr.mxu0 0.0
      %v617 = vand.u32 %v450, 4294901760
      %v618 = vsub.f32 %v450, %v617
      %v619 = vand.u32 %v618, 4294901760
      %v620 = vsub.f32 %v618, %v619
      %v621 = vand.u32 %v620, 4294901760
      %622 = vmatpush1.msra.mxu0 %v621
      %623 = vmatprep.subr.mxu0 0.0
      %v624 = vand.u32 %v451, 4294901760
      %v625 = vsub.f32 %v451, %v624
      %v626 = vand.u32 %v625, 4294901760
      %v627 = vsub.f32 %v625, %v626
      %v628 = vand.u32 %v627, 4294901760
      %629 = vmatpush1.msra.mxu0 %v628
      %630 = vmatprep.subr.mxu0 0.0
      %v631 = vand.u32 %v452, 4294901760
      %v632 = vsub.f32 %v452, %v631
      %v633 = vand.u32 %v632, 4294901760
      %v634 = vsub.f32 %v632, %v633
      %v635 = vand.u32 %v634, 4294901760
      %636 = vmatpush1.msra.mxu0 %v635
      %637 = vmatprep.subr.mxu0 0.0
      %v638 = vand.u32 %v453, 4294901760
      %v639 = vsub.f32 %v453, %v638
      %v640 = vand.u32 %v639, 4294901760
      %v641 = vsub.f32 %v639, %v640
      %v642 = vand.u32 %v641, 4294901760
      %643 = vmatpush1.msra.mxu0 %v642
      %644 = vmatprep.subr.mxu0 0.0
      %v645 = vand.u32 %v454, 4294901760
      %v646 = vsub.f32 %v454, %v645
      %v647 = vand.u32 %v646, 4294901760
      %v648 = vsub.f32 %v646, %v647
      %v649 = vand.u32 %v648, 4294901760
      %650 = vmatpush1.msra.mxu0 %v649
      %651 = vmatprep.subr.mxu0 0.0
      %v652 = vand.u32 %v455, 4294901760
      %v653 = vsub.f32 %v455, %v652
      %v654 = vand.u32 %v653, 4294901760
      %v655 = vsub.f32 %v653, %v654
      %v656 = vand.u32 %v655, 4294901760
      %657 = vmatpush1.msra.mxu0 %v656
      %658 = vmatprep.subr.mxu0 0.0
      %v659 = vand.u32 %v456, 4294901760
      %v660 = vsub.f32 %v456, %v659
      %v661 = vand.u32 %v660, 4294901760
      %v662 = vsub.f32 %v660, %v661
      %v663 = vand.u32 %v662, 4294901760
      %664 = vmatpush1.msra.mxu0 %v663
      %665 = vmatprep.subr.mxu0 0.0
      %v666 = vand.u32 %v457, 4294901760
      %v667 = vsub.f32 %v457, %v666
      %v668 = vand.u32 %v667, 4294901760
      %v669 = vsub.f32 %v667, %v668
      %v670 = vand.u32 %v669, 4294901760
      %671 = vmatpush1.msra.mxu0 %v670
      %672 = vmatprep.subr.mxu0 0.0
      %v673 = vand.u32 %v458, 4294901760
      %v674 = vsub.f32 %v458, %v673
      %v675 = vand.u32 %v674, 4294901760
      %v676 = vsub.f32 %v674, %v675
      %v677 = vand.u32 %v676, 4294901760
      %678 = vmatpush1.msra.mxu0 %v677
      %679 = vmatprep.subr.mxu0 0.0
      %v680 = vand.u32 %v459, 4294901760
      %v681 = vsub.f32 %v459, %v680
      %v682 = vand.u32 %v681, 4294901760
      %v683 = vsub.f32 %v681, %v682
      %v684 = vand.u32 %v683, 4294901760
      %685 = vmatpush1.msra.mxu0 %v684
      %686 = vmatprep.subr.mxu0 0.0
      %v687 = vand.u32 %v460, 4294901760
      %v688 = vsub.f32 %v460, %v687
      %v689 = vand.u32 %v688, 4294901760
      %v690 = vsub.f32 %v688, %v689
      %v691 = vand.u32 %v690, 4294901760
      %692 = vmatpush1.msra.mxu0 %v691
      %693 = vmatprep.subr.mxu0 0.0
      %694 = vmatpush1.msra.mxu0 0.0
      %695 = vmatprep.subr.mxu0 0.0
      %696 = vmatpush1.msra.mxu0 0.0
      %697 = vmatprep.subr.mxu0 0.0
      %698 = vmatpush1.msra.mxu0 0.0
      %699 = vmatprep.subr.mxu0 0.0
      %700 = vmatpush1.msra.mxu0 0.0
      %701 = vmatprep.subr.mxu0 0.0
      %702 = vmatpush1.msra.mxu0 0.0
      %703 = vmatprep.subr.mxu0 0.0
      %704 = vmatpush1.msra.mxu0 0.0
      %705 = vmatprep.subr.mxu0 0.0
      %706 = vmatpush1.msra.mxu0 0.0
      %707 = vmatprep.subr.mxu0 0.0
      %708 = vmatpush1.msra.mxu0 0.0
      %709 = vmatprep.subr.mxu0 0.0
      %710 = vmatpush1.msra.mxu0 0.0
      %711 = vmatprep.subr.mxu0 0.0
      %712 = vmatpush1.msra.mxu0 0.0
      %713 = vmatprep.subr.mxu0 0.0
      %714 = vmatpush1.msra.mxu0 0.0
      %715 = vmatprep.subr.mxu0 0.0
      %716 = vmatpush1.msra.mxu0 0.0
      %717 = vmatprep.subr.mxu0 0.0
      %718 = vmatpush1.msra.mxu0 0.0
      %719 = vmatprep.subr.mxu0 0.0
      %720 = vmatpush1.msra.mxu0 0.0
      %721 = vmatprep.subr.mxu0 0.0
      %722 = vmatpush1.msra.mxu0 0.0
      %723 = vmatprep.subr.mxu0 0.0
      %724 = vmatpush1.msra.mxu0 0.0
      %725 = vmatprep.subr.mxu0 0.0
      %726 = vmatpush1.msra.mxu0 0.0
      %727 = vmatprep.subr.mxu0 0.0
      %728 = vmatpush1.msra.mxu0 0.0
      %729 = vmatprep.subr.mxu0 0.0
      %730 = vmatpush1.msra.mxu0 0.0
      %731 = vmatprep.subr.mxu0 0.0
      %732 = vmatpush1.msra.mxu0 0.0
      %733 = vmatprep.mubr.f32.mxu0 0.0
      %v734 = vand.u32 %v507, 4294901760
      %735 = vmatmul.mubr.f32.gmra.mrb[0].mxu0 %v734
      %v736 = vpop.f32.mrb[0].mxu0
      %v737 = vadd.f32 %v596, %v736
      %v738 = vpop.f32.mrb[0].mxu0
      %739 = vmatprep.mubr.f32.mxu0 0.0
      %v740 = vand.u32 %v510, 4294901760
      %741 = vmatmul.mubr.f32.gmra.mrb[0].mxu0 %v740
      %v742 = vpop.f32.mrb[0].mxu0
      %v743 = vadd.f32 %v606, %v742
      %v744 = vpop.f32.mrb[0].mxu0
      %745 = vdwg.mxu0
      %746 = vmatprep.subr.mxu0 0.0
      %v747 = vand.u32 %v449, 4294901760
      %v748 = vsub.f32 %v449, %v747
      %749 = vmatpush1.msra.mxu0 %v748
      %750 = vmatprep.subr.mxu0 0.0
      %v751 = vand.u32 %v450, 4294901760
      %v752 = vsub.f32 %v450, %v751
      %753 = vmatpush1.msra.mxu0 %v752
      %754 = vmatprep.subr.mxu0 0.0
      %v755 = vand.u32 %v451, 4294901760
      %v756 = vsub.f32 %v451, %v755
      %757 = vmatpush1.msra.mxu0 %v756
      %758 = vmatprep.subr.mxu0 0.0
      %v759 = vand.u32 %v452, 4294901760
      %v760 = vsub.f32 %v452, %v759
      %761 = vmatpush1.msra.mxu0 %v760
      %762 = vmatprep.subr.mxu0 0.0
      %v763 = vand.u32 %v453, 4294901760
      %v764 = vsub.f32 %v453, %v763
      %765 = vmatpush1.msra.mxu0 %v764
      %766 = vmatprep.subr.mxu0 0.0
      %v767 = vand.u32 %v454, 4294901760
      %v768 = vsub.f32 %v454, %v767
      %769 = vmatpush1.msra.mxu0 %v768
      %770 = vmatprep.subr.mxu0 0.0
      %v771 = vand.u32 %v455, 4294901760
      %v772 = vsub.f32 %v455, %v771
      %773 = vmatpush1.msra.mxu0 %v772
      %774 = vmatprep.subr.mxu0 0.0
      %v775 = vand.u32 %v456, 4294901760
      %v776 = vsub.f32 %v456, %v775
      %777 = vmatpush1.msra.mxu0 %v776
      %778 = vmatprep.subr.mxu0 0.0
      %v779 = vand.u32 %v457, 4294901760
      %v780 = vsub.f32 %v457, %v779
      %781 = vmatpush1.msra.mxu0 %v780
      %782 = vmatprep.subr.mxu0 0.0
      %v783 = vand.u32 %v458, 4294901760
      %v784 = vsub.f32 %v458, %v783
      %785 = vmatpush1.msra.mxu0 %v784
      %786 = vmatprep.subr.mxu0 0.0
      %v787 = vand.u32 %v459, 4294901760
      %v788 = vsub.f32 %v459, %v787
      %789 = vmatpush1.msra.mxu0 %v788
      %790 = vmatprep.subr.mxu0 0.0
      %v791 = vand.u32 %v460, 4294901760
      %v792 = vsub.f32 %v460, %v791
      %793 = vmatpush1.msra.mxu0 %v792
      %794 = vmatprep.subr.mxu0 0.0
      %795 = vmatpush1.msra.mxu0 0.0
      %796 = vmatprep.subr.mxu0 0.0
      %797 = vmatpush1.msra.mxu0 0.0
      %798 = vmatprep.subr.mxu0 0.0
      %799 = vmatpush1.msra.mxu0 0.0
      %800 = vmatprep.subr.mxu0 0.0
      %801 = vmatpush1.msra.mxu0 0.0
      %802 = vmatprep.subr.mxu0 0.0
      %803 = vmatpush1.msra.mxu0 0.0
      %804 = vmatprep.subr.mxu0 0.0
      %805 = vmatpush1.msra.mxu0 0.0
      %806 = vmatprep.subr.mxu0 0.0
      %807 = vmatpush1.msra.mxu0 0.0
      %808 = vmatprep.subr.mxu0 0.0
      %809 = vmatpush1.msra.mxu0 0.0
      %810 = vmatprep.subr.mxu0 0.0
      %811 = vmatpush1.msra.mxu0 0.0
      %812 = vmatprep.subr.mxu0 0.0
      %813 = vmatpush1.msra.mxu0 0.0
      %814 = vmatprep.subr.mxu0 0.0
      %815 = vmatpush1.msra.mxu0 0.0
      %816 = vmatprep.subr.mxu0 0.0
      %817 = vmatpush1.msra.mxu0 0.0
      %818 = vmatprep.subr.mxu0 0.0
      %819 = vmatpush1.msra.mxu0 0.0
      %820 = vmatprep.subr.mxu0 0.0
      %821 = vmatpush1.msra.mxu0 0.0
      %822 = vmatprep.subr.mxu0 0.0
      %823 = vmatpush1.msra.mxu0 0.0
      %824 = vmatprep.subr.mxu0 0.0
      %825 = vmatpush1.msra.mxu0 0.0
      %826 = vmatprep.subr.mxu0 0.0
      %827 = vmatpush1.msra.mxu0 0.0
      %828 = vmatprep.subr.mxu0 0.0
      %829 = vmatpush1.msra.mxu0 0.0
      %830 = vmatprep.subr.mxu0 0.0
      %831 = vmatpush1.msra.mxu0 0.0
      %832 = vmatprep.subr.mxu0 0.0
      %833 = vmatpush1.msra.mxu0 0.0
      %834 = vmatprep.mubr.f32.mxu0 0.0
      %v835 = vand.u32 %v507, 4294901760
      %v836 = vsub.f32 %v507, %v835
      %837 = vmatmul.mubr.f32.gmra.mrb[0].mxu0 %v836
      %v838 = vpop.f32.mrb[0].mxu0
      %v839 = vadd.f32 %v737, %v838
      %v840 = vpop.f32.mrb[0].mxu0
      %841 = vmatprep.mubr.f32.mxu0 0.0
      %v842 = vand.u32 %v510, 4294901760
      %v843 = vsub.f32 %v510, %v842
      %844 = vmatmul.mubr.f32.gmra.mrb[0].mxu0 %v843
      %v845 = vpop.f32.mrb[0].mxu0
      %v846 = vadd.f32 %v743, %v845
      %v847 = vpop.f32.mrb[0].mxu0
      %848 = vdwg.mxu0
      %849 = vmatprep.subr.mxu0 0.0
      %v850 = vand.u32 %v449, 4294901760
      %851 = vmatpush1.msra.mxu0 %v850
      %852 = vmatprep.subr.mxu0 0.0
      %v853 = vand.u32 %v450, 4294901760
      %854 = vmatpush1.msra.mxu0 %v853
      %855 = vmatprep.subr.mxu0 0.0
      %v856 = vand.u32 %v451, 4294901760
      %857 = vmatpush1.msra.mxu0 %v856
      %858 = vmatprep.subr.mxu0 0.0
      %v859 = vand.u32 %v452, 4294901760
      %860 = vmatpush1.msra.mxu0 %v859
      %861 = vmatprep.subr.mxu0 0.0
      %v862 = vand.u32 %v453, 4294901760
      %863 = vmatpush1.msra.mxu0 %v862
      %864 = vmatprep.subr.mxu0 0.0
      %v865 = vand.u32 %v454, 4294901760
      %866 = vmatpush1.msra.mxu0 %v865
      %867 = vmatprep.subr.mxu0 0.0
      %v868 = vand.u32 %v455, 4294901760
      %869 = vmatpush1.msra.mxu0 %v868
      %870 = vmatprep.subr.mxu0 0.0
      %v871 = vand.u32 %v456, 4294901760
      %872 = vmatpush1.msra.mxu0 %v871
      %873 = vmatprep.subr.mxu0 0.0
      %v874 = vand.u32 %v457, 4294901760
      %875 = vmatpush1.msra.mxu0 %v874
      %876 = vmatprep.subr.mxu0 0.0
      %v877 = vand.u32 %v458, 4294901760
      %878 = vmatpush1.msra.mxu0 %v877
      %879 = vmatprep.subr.mxu0 0.0
      %v880 = vand.u32 %v459, 4294901760
      %881 = vmatpush1.msra.mxu0 %v880
      %882 = vmatprep.subr.mxu0 0.0
      %v883 = vand.u32 %v460, 4294901760
      %884 = vmatpush1.msra.mxu0 %v883
      %885 = vmatprep.subr.mxu0 0.0
      %886 = vmatpush1.msra.mxu0 0.0
      %887 = vmatprep.subr.mxu0 0.0
      %888 = vmatpush1.msra.mxu0 0.0
      %889 = vmatprep.subr.mxu0 0.0
      %890 = vmatpush1.msra.mxu0 0.0
      %891 = vmatprep.subr.mxu0 0.0
      %892 = vmatpush1.msra.mxu0 0.0
      %893 = vmatprep.subr.mxu0 0.0
      %894 = vmatpush1.msra.mxu0 0.0
      %895 = vmatprep.subr.mxu0 0.0
      %896 = vmatpush1.msra.mxu0 0.0
      %897 = vmatprep.subr.mxu0 0.0
      %898 = vmatpush1.msra.mxu0 0.0
      %899 = vmatprep.subr.mxu0 0.0
      %900 = vmatpush1.msra.mxu0 0.0
      %901 = vmatprep.subr.mxu0 0.0
      %902 = vmatpush1.msra.mxu0 0.0
      %903 = vmatprep.subr.mxu0 0.0
      %904 = vmatpush1.msra.mxu0 0.0
      %905 = vmatprep.subr.mxu0 0.0
      %906 = vmatpush1.msra.mxu0 0.0
      %907 = vmatprep.subr.mxu0 0.0
      %908 = vmatpush1.msra.mxu0 0.0
      %909 = vmatprep.subr.mxu0 0.0
      %910 = vmatpush1.msra.mxu0 0.0
      %911 = vmatprep.subr.mxu0 0.0
      %912 = vmatpush1.msra.mxu0 0.0
      %913 = vmatprep.subr.mxu0 0.0
      %914 = vmatpush1.msra.mxu0 0.0
      %915 = vmatprep.subr.mxu0 0.0
      %916 = vmatpush1.msra.mxu0 0.0
      %917 = vmatprep.subr.mxu0 0.0
      %918 = vmatpush1.msra.mxu0 0.0
      %919 = vmatprep.subr.mxu0 0.0
      %920 = vmatpush1.msra.mxu0 0.0
      %921 = vmatprep.subr.mxu0 0.0
      %922 = vmatpush1.msra.mxu0 0.0
      %923 = vmatprep.subr.mxu0 0.0
      %924 = vmatpush1.msra.mxu0 0.0
      %925 = vmatprep.mubr.f32.mxu0 0.0
      %v926 = vand.u32 %v507, 4294901760
      %v927 = vsub.f32 %v507, %v926
      %v928 = vand.u32 %v927, 4294901760
      %929 = vmatmul.mubr.f32.gmra.mrb[0].mxu0 %v928
      %v930 = vpop.f32.mrb[0].mxu0
      %v931 = vadd.f32 %v839, %v930
      %v932 = vpop.f32.mrb[0].mxu0
      %933 = vmatprep.mubr.f32.mxu0 0.0
      %v934 = vand.u32 %v510, 4294901760
      %v935 = vsub.f32 %v510, %v934
      %v936 = vand.u32 %v935, 4294901760
      %937 = vmatmul.mubr.f32.gmra.mrb[0].mxu0 %v936
      %v938 = vpop.f32.mrb[0].mxu0
      %v939 = vadd.f32 %v846, %v938
      %v940 = vpop.f32.mrb[0].mxu0
      %941 = vdwg.mxu0
      %942 = vmatprep.subr.mxu0 0.0
      %v943 = vand.u32 %v449, 4294901760
      %v944 = vsub.f32 %v449, %v943
      %v945 = vand.u32 %v944, 4294901760
      %946 = vmatpush1.msra.mxu0 %v945
      %947 = vmatprep.subr.mxu0 0.0
      %v948 = vand.u32 %v450, 4294901760
      %v949 = vsub.f32 %v450, %v948
      %v950 = vand.u32 %v949, 4294901760
      %951 = vmatpush1.msra.mxu0 %v950
      %952 = vmatprep.subr.mxu0 0.0
      %v953 = vand.u32 %v451, 4294901760
      %v954 = vsub.f32 %v451, %v953
      %v955 = vand.u32 %v954, 4294901760
      %956 = vmatpush1.msra.mxu0 %v955
      %957 = vmatprep.subr.mxu0 0.0
      %v958 = vand.u32 %v452, 4294901760
      %v959 = vsub.f32 %v452, %v958
      %v960 = vand.u32 %v959, 4294901760
      %961 = vmatpush1.msra.mxu0 %v960
      %962 = vmatprep.subr.mxu0 0.0
      %v963 = vand.u32 %v453, 4294901760
      %v964 = vsub.f32 %v453, %v963
      %v965 = vand.u32 %v964, 4294901760
      %966 = vmatpush1.msra.mxu0 %v965
      %967 = vmatprep.subr.mxu0 0.0
      %v968 = vand.u32 %v454, 4294901760
      %v969 = vsub.f32 %v454, %v968
      %v970 = vand.u32 %v969, 4294901760
      %971 = vmatpush1.msra.mxu0 %v970
      %972 = vmatprep.subr.mxu0 0.0
      %v973 = vand.u32 %v455, 4294901760
      %v974 = vsub.f32 %v455, %v973
      %v975 = vand.u32 %v974, 4294901760
      %976 = vmatpush1.msra.mxu0 %v975
      %977 = vmatprep.subr.mxu0 0.0
      %v978 = vand.u32 %v456, 4294901760
      %v979 = vsub.f32 %v456, %v978
      %v980 = vand.u32 %v979, 4294901760
      %981 = vmatpush1.msra.mxu0 %v980
      %982 = vmatprep.subr.mxu0 0.0
      %v983 = vand.u32 %v457, 4294901760
      %v984 = vsub.f32 %v457, %v983
      %v985 = vand.u32 %v984, 4294901760
      %986 = vmatpush1.msra.mxu0 %v985
      %987 = vmatprep.subr.mxu0 0.0
      %v988 = vand.u32 %v458, 4294901760
      %v989 = vsub.f32 %v458, %v988
      %v990 = vand.u32 %v989, 4294901760
      %991 = vmatpush1.msra.mxu0 %v990
      %992 = vmatprep.subr.mxu0 0.0
      %v993 = vand.u32 %v459, 4294901760
      %v994 = vsub.f32 %v459, %v993
      %v995 = vand.u32 %v994, 4294901760
      %996 = vmatpush1.msra.mxu0 %v995
      %997 = vmatprep.subr.mxu0 0.0
      %v998 = vand.u32 %v460, 4294901760
      %v999 = vsub.f32 %v460, %v998
      %v1000 = vand.u32 %v999, 4294901760
      %1001 = vmatpush1.msra.mxu0 %v1000
      %1002 = vmatprep.subr.mxu0 0.0
      %1003 = vmatpush1.msra.mxu0 0.0
      %1004 = vmatprep.subr.mxu0 0.0
      %1005 = vmatpush1.msra.mxu0 0.0
      %1006 = vmatprep.subr.mxu0 0.0
      %1007 = vmatpush1.msra.mxu0 0.0
      %1008 = vmatprep.subr.mxu0 0.0
      %1009 = vmatpush1.msra.mxu0 0.0
      %1010 = vmatprep.subr.mxu0 0.0
      %1011 = vmatpush1.msra.mxu0 0.0
      %1012 = vmatprep.subr.mxu0 0.0
      %1013 = vmatpush1.msra.mxu0 0.0
      %1014 = vmatprep.subr.mxu0 0.0
      %1015 = vmatpush1.msra.mxu0 0.0
      %1016 = vmatprep.subr.mxu0 0.0
      %1017 = vmatpush1.msra.mxu0 0.0
      %1018 = vmatprep.subr.mxu0 0.0
      %1019 = vmatpush1.msra.mxu0 0.0
      %1020 = vmatprep.subr.mxu0 0.0
      %1021 = vmatpush1.msra.mxu0 0.0
      %1022 = vmatprep.subr.mxu0 0.0
      %1023 = vmatpush1.msra.mxu0 0.0
      %1024 = vmatprep.subr.mxu0 0.0
      %1025 = vmatpush1.msra.mxu0 0.0
      %1026 = vmatprep.subr.mxu0 0.0
      %1027 = vmatpush1.msra.mxu0 0.0
      %1028 = vmatprep.subr.mxu0 0.0
      %1029 = vmatpush1.msra.mxu0 0.0
      %1030 = vmatprep.subr.mxu0 0.0
      %1031 = vmatpush1.msra.mxu0 0.0
      %1032 = vmatprep.subr.mxu0 0.0
      %1033 = vmatpush1.msra.mxu0 0.0
      %1034 = vmatprep.subr.mxu0 0.0
      %1035 = vmatpush1.msra.mxu0 0.0
      %1036 = vmatprep.subr.mxu0 0.0
      %1037 = vmatpush1.msra.mxu0 0.0
      %1038 = vmatprep.subr.mxu0 0.0
      %1039 = vmatpush1.msra.mxu0 0.0
      %1040 = vmatprep.subr.mxu0 0.0
      %1041 = vmatpush1.msra.mxu0 0.0
      %1042 = vmatprep.mubr.f32.mxu0 0.0
      %v1043 = vand.u32 %v507, 4294901760
      %1044 = vmatmul.mubr.f32.gmra.mrb[0].mxu0 %v1043
      %v1045 = vpop.f32.mrb[0].mxu0
      %v1046 = vadd.f32 %v931, %v1045
      %v1047 = vpop.f32.mrb[0].mxu0
      %1048 = vmatprep.mubr.f32.mxu0 0.0
      %v1049 = vand.u32 %v510, 4294901760
      %1050 = vmatmul.mubr.f32.gmra.mrb[0].mxu0 %v1049
      %v1051 = vpop.f32.mrb[0].mxu0
      %v1052 = vadd.f32 %v939, %v1051
      %v1053 = vpop.f32.mrb[0].mxu0
      %1054 = vdwg.mxu0
      %1055 = vmatprep.subr.mxu0 0.0
      %v1056 = vand.u32 %v449, 4294901760
      %1057 = vmatpush1.msra.mxu0 %v1056
      %1058 = vmatprep.subr.mxu0 0.0
      %v1059 = vand.u32 %v450, 4294901760
      %1060 = vmatpush1.msra.mxu0 %v1059
      %1061 = vmatprep.subr.mxu0 0.0
      %v1062 = vand.u32 %v451, 4294901760
      %1063 = vmatpush1.msra.mxu0 %v1062
      %1064 = vmatprep.subr.mxu0 0.0
      %v1065 = vand.u32 %v452, 4294901760
      %1066 = vmatpush1.msra.mxu0 %v1065
      %1067 = vmatprep.subr.mxu0 0.0
      %v1068 = vand.u32 %v453, 4294901760
      %1069 = vmatpush1.msra.mxu0 %v1068
      %1070 = vmatprep.subr.mxu0 0.0
      %v1071 = vand.u32 %v454, 4294901760
      %1072 = vmatpush1.msra.mxu0 %v1071
      %1073 = vmatprep.subr.mxu0 0.0
      %v1074 = vand.u32 %v455, 4294901760
      %1075 = vmatpush1.msra.mxu0 %v1074
      %1076 = vmatprep.subr.mxu0 0.0
      %v1077 = vand.u32 %v456, 4294901760
      %1078 = vmatpush1.msra.mxu0 %v1077
      %1079 = vmatprep.subr.mxu0 0.0
      %v1080 = vand.u32 %v457, 4294901760
      %1081 = vmatpush1.msra.mxu0 %v1080
      %1082 = vmatprep.subr.mxu0 0.0
      %v1083 = vand.u32 %v458, 4294901760
      %1084 = vmatpush1.msra.mxu0 %v1083
      %1085 = vmatprep.subr.mxu0 0.0
      %v1086 = vand.u32 %v459, 4294901760
      %1087 = vmatpush1.msra.mxu0 %v1086
      %1088 = vmatprep.subr.mxu0 0.0
      %v1089 = vand.u32 %v460, 4294901760
      %1090 = vmatpush1.msra.mxu0 %v1089
      %1091 = vmatprep.subr.mxu0 0.0
      %1092 = vmatpush1.msra.mxu0 0.0
      %1093 = vmatprep.subr.mxu0 0.0
      %1094 = vmatpush1.msra.mxu0 0.0
      %1095 = vmatprep.subr.mxu0 0.0
      %1096 = vmatpush1.msra.mxu0 0.0
      %1097 = vmatprep.subr.mxu0 0.0
      %1098 = vmatpush1.msra.mxu0 0.0
      %1099 = vmatprep.subr.mxu0 0.0
      %1100 = vmatpush1.msra.mxu0 0.0
      %1101 = vmatprep.subr.mxu0 0.0
      %1102 = vmatpush1.msra.mxu0 0.0
      %1103 = vmatprep.subr.mxu0 0.0
      %1104 = vmatpush1.msra.mxu0 0.0
      %1105 = vmatprep.subr.mxu0 0.0
      %1106 = vmatpush1.msra.mxu0 0.0
      %1107 = vmatprep.subr.mxu0 0.0
      %1108 = vmatpush1.msra.mxu0 0.0
      %1109 = vmatprep.subr.mxu0 0.0
      %1110 = vmatpush1.msra.mxu0 0.0
      %1111 = vmatprep.subr.mxu0 0.0
      %1112 = vmatpush1.msra.mxu0 0.0
      %1113 = vmatprep.subr.mxu0 0.0
      %1114 = vmatpush1.msra.mxu0 0.0
      %1115 = vmatprep.subr.mxu0 0.0
      %1116 = vmatpush1.msra.mxu0 0.0
      %1117 = vmatprep.subr.mxu0 0.0
      %1118 = vmatpush1.msra.mxu0 0.0
      %1119 = vmatprep.subr.mxu0 0.0
      %1120 = vmatpush1.msra.mxu0 0.0
      %1121 = vmatprep.subr.mxu0 0.0
      %1122 = vmatpush1.msra.mxu0 0.0
      %1123 = vmatprep.subr.mxu0 0.0
      %1124 = vmatpush1.msra.mxu0 0.0
      %1125 = vmatprep.subr.mxu0 0.0
      %1126 = vmatpush1.msra.mxu0 0.0
      %1127 = vmatprep.subr.mxu0 0.0
      %1128 = vmatpush1.msra.mxu0 0.0
      %1129 = vmatprep.subr.mxu0 0.0
      %1130 = vmatpush1.msra.mxu0 0.0
      %1131 = vmatprep.mubr.f32.mxu0 0.0
      %v1132 = vand.u32 %v507, 4294901760
      %1133 = vmatmul.mubr.f32.gmra.mrb[0].mxu0 %v1132
      %v1134 = vpop.f32.mrb[0].mxu0
      %v1135 = vadd.f32 %v1046, %v1134
      %v1136 = vpop.f32.mrb[0].mxu0
      %1137 = vmatprep.mubr.f32.mxu0 0.0
      %v1138 = vand.u32 %v510, 4294901760
      %1139 = vmatmul.mubr.f32.gmra.mrb[0].mxu0 %v1138
      %v1140 = vpop.f32.mrb[0].mxu0
      %v1141 = vadd.f32 %v1052, %v1140
      %v1142 = vpop.f32.mrb[0].mxu0
      %1143 = vdwg.mxu0
      %vm1144 = vcmp.gt.f32.partialorder %v1135, 20.0
      %vm1145 = vcmp.gt.f32.partialorder %v1141, 20.0
      %v1146 = vmin.f32 %v1135, 20.0
      %v1147 = vmin.f32 %v1141, 20.0
      %v1148 = vmul.f32 %v1146, 1.442695
      %v1149 = vpow.pop %v1148
      %v1150 = vmul.f32 %v1147, 1.442695
      %v1151 = vpow.pop %v1150
      %v1152 = vadd.f32 %v1149, 1.0
      %v1153 = vadd.f32 %v1151, 1.0
      %v1154 = vlog2.pop %v1152
      %v1155 = vmul.f32 %v1154, 0.6931472
      %v1156 = vlog2.pop %v1153
      %v1157 = vmul.f32 %v1156, 0.6931472
      %v1158 = vsel %vm1144, %v1135, %v1155
      %v1159 = vsel %vm1145, %v1141, %v1157
      %v1160 = vsel %vm323, %v1158, 0.0
      %v1161 = vsel %vm323, %v1159, 0.0
      %v1162 = vadd.f32 %v1160, %v1161
      %v1163 = vrot.slane %v1162, 4
      %v1164 = vadd.f32 %v1162, %v1163
      %v1165 = vrot.slane %v1164, 2
      %v1166 = vadd.f32 %v1164, %v1165
      %v1167 = vrot.slane %v1166, 1
      %v1168 = vadd.f32 %v1166, %v1167
      %v1169 = vrcp.pop 16.0
      %v1170 = vmul.f32 %v1168, %v1169
      %v1171 = vsub.f32 %v1158, %v1170
      %v1172 = vsub.f32 %v1159, %v1170
      %v1173 = vmul.f32 %v1171, %v1171
      %v1174 = vmul.f32 %v1172, %v1172
      %v1175 = vsel %vm323, %v1173, 0.0
      %v1176 = vsel %vm323, %v1174, 0.0
      %v1177 = vadd.f32 %v1175, %v1176
      %v1178 = vrot.slane %v1177, 4
      %v1179 = vadd.f32 %v1177, %v1178
      %v1180 = vrot.slane %v1179, 2
      %v1181 = vadd.f32 %v1179, %v1180
      %v1182 = vrot.slane %v1181, 1
      %v1183 = vadd.f32 %v1181, %v1182
      %v1184 = vmul.f32 %v1183, %v1169
      %v1185 = vlaneseq
      %v1186 = vshrl.u32 %v1185, 7
      %v1187 = vsub.s32 0, %v1186
      %v1188 = vrot.slane %v470, %v1187
      %v1189 = vmul.f32 %v1188, %v1171
      %v1190 = vmul.f32 %v1188, %v1172
      %v1191 = vadd.f32 %v1184, 1e-05
      %v1192 = vrsqrt.pop %v1191
      %v1193 = vmul.f32 %v1189, %v1192
      %v1194 = vmul.f32 %v1190, %v1192
      %v1195 = vlaneseq
      %v1196 = vshrl.u32 %v1195, 7
      %v1197 = vsub.s32 0, %v1196
      %v1198 = vrot.slane %v471, %v1197
      %v1199 = vadd.f32 %v1193, %v1198
      %v1200 = vadd.f32 %v1194, %v1198
      %v1201 = vlaneseq
      %v1202 = vshrl.u32 %v1201, 7
      %v1203 = vsub.s32 0, %v1202
      %v1204 = vrot.slane %v472, %v1203
      %v1206 = vsel %vm323, %v1199, 0
      %v1209 = vsel %vm323, %v1200, 0
      %1211 = vmatprep.subr.mxu0 0.0
      %v1212 = vand.u32 %v461, 4294901760
      %1213 = vmatpush1.msra.mxu0 %v1212
      %1214 = vmatprep.subr.mxu0 0.0
      %v1215 = vand.u32 %v462, 4294901760
      %1216 = vmatpush1.msra.mxu0 %v1215
      %1217 = vmatprep.subr.mxu0 0.0
      %v1218 = vand.u32 %v463, 4294901760
      %1219 = vmatpush1.msra.mxu0 %v1218
      %1220 = vmatprep.subr.mxu0 0.0
      %v1221 = vand.u32 %v464, 4294901760
      %1222 = vmatpush1.msra.mxu0 %v1221
      %1223 = vmatprep.subr.mxu0 0.0
      %1224 = vmatpush1.msra.mxu0 0.0
      %1225 = vmatprep.subr.mxu0 0.0
      %1226 = vmatpush1.msra.mxu0 0.0
      %1227 = vmatprep.subr.mxu0 0.0
      %1228 = vmatpush1.msra.mxu0 0.0
      %1229 = vmatprep.subr.mxu0 0.0
      %1230 = vmatpush1.msra.mxu0 0.0
      %1231 = vmatprep.subr.mxu0 0.0
      %1232 = vmatpush1.msra.mxu0 0.0
      %1233 = vmatprep.subr.mxu0 0.0
      %1234 = vmatpush1.msra.mxu0 0.0
      %1235 = vmatprep.subr.mxu0 0.0
      %1236 = vmatpush1.msra.mxu0 0.0
      %1237 = vmatprep.subr.mxu0 0.0
      %1238 = vmatpush1.msra.mxu0 0.0
      %1239 = vmatprep.subr.mxu0 0.0
      %1240 = vmatpush1.msra.mxu0 0.0
      %1241 = vmatprep.subr.mxu0 0.0
      %1242 = vmatpush1.msra.mxu0 0.0
      %1243 = vmatprep.subr.mxu0 0.0
      %1244 = vmatpush1.msra.mxu0 0.0
      %1245 = vmatprep.subr.mxu0 0.0
      %1246 = vmatpush1.msra.mxu0 0.0
      %1247 = vmatprep.subr.mxu0 0.0
      %1248 = vmatpush1.msra.mxu0 0.0
      %1249 = vmatprep.subr.mxu0 0.0
      %1250 = vmatpush1.msra.mxu0 0.0
      %1251 = vmatprep.subr.mxu0 0.0
      %1252 = vmatpush1.msra.mxu0 0.0
      %1253 = vmatprep.subr.mxu0 0.0
      %1254 = vmatpush1.msra.mxu0 0.0
      %1255 = vmatprep.subr.mxu0 0.0
      %1256 = vmatpush1.msra.mxu0 0.0
      %1257 = vmatprep.subr.mxu0 0.0
      %1258 = vmatpush1.msra.mxu0 0.0
      %1259 = vmatprep.subr.mxu0 0.0
      %1260 = vmatpush1.msra.mxu0 0.0
      %1261 = vmatprep.subr.mxu0 0.0
      %1262 = vmatpush1.msra.mxu0 0.0
      %1263 = vmatprep.subr.mxu0 0.0
      %1264 = vmatpush1.msra.mxu0 0.0
      %1265 = vmatprep.subr.mxu0 0.0
      %1266 = vmatpush1.msra.mxu0 0.0
      %1267 = vmatprep.subr.mxu0 0.0
      %1268 = vmatpush1.msra.mxu0 0.0
      %1269 = vmatprep.subr.mxu0 0.0
      %1270 = vmatpush1.msra.mxu0 0.0
      %1271 = vmatprep.subr.mxu0 0.0
      %1272 = vmatpush1.msra.mxu0 0.0
      %1273 = vmatprep.subr.mxu0 0.0
      %1274 = vmatpush1.msra.mxu0 0.0
      %1275 = vmatprep.subr.mxu0 0.0
      %1276 = vmatpush1.msra.mxu0 0.0
      %1277 = vmatprep.subr.mxu0 0.0
      %1278 = vmatpush1.msra.mxu0 0.0
      %1279 = vmatprep.mubr.f32.mxu0 0.0
      %v1280 = vand.u32 %v1206, 4294901760
      %v1281 = vsub.f32 %v1206, %v1280
      %v1282 = vand.u32 %v1281, 4294901760
      %v1283 = vsub.f32 %v1281, %v1282
      %v1284 = vand.u32 %v1283, 4294901760
      %1285 = vmatmul.mubr.f32.gmra.mrb[0].mxu0 %v1284
      %v1286 = vpop.f32.mrb[0].mxu0
      %v1287 = vadd.f32 %v1204, %v1286
      %v1288 = vpop.f32.mrb[0].mxu0
      %1289 = vmatprep.mubr.f32.mxu0 0.0
      %v1290 = vand.u32 %v1209, 4294901760
      %v1291 = vsub.f32 %v1209, %v1290
      %v1292 = vand.u32 %v1291, 4294901760
      %v1293 = vsub.f32 %v1291, %v1292
      %v1294 = vand.u32 %v1293, 4294901760
      %1295 = vmatmul.mubr.f32.gmra.mrb[0].mxu0 %v1294
      %v1296 = vpop.f32.mrb[0].mxu0
      %v1297 = vadd.f32 %v1204, %v1296
      %v1298 = vpop.f32.mrb[0].mxu0
      %1299 = vdwg.mxu0
      %1300 = vmatprep.subr.mxu0 0.0
      %v1301 = vand.u32 %v461, 4294901760
      %v1302 = vsub.f32 %v461, %v1301
      %v1303 = vand.u32 %v1302, 4294901760
      %v1304 = vsub.f32 %v1302, %v1303
      %v1305 = vand.u32 %v1304, 4294901760
      %1306 = vmatpush1.msra.mxu0 %v1305
      %1307 = vmatprep.subr.mxu0 0.0
      %v1308 = vand.u32 %v462, 4294901760
      %v1309 = vsub.f32 %v462, %v1308
      %v1310 = vand.u32 %v1309, 4294901760
      %v1311 = vsub.f32 %v1309, %v1310
      %v1312 = vand.u32 %v1311, 4294901760
      %1313 = vmatpush1.msra.mxu0 %v1312
      %1314 = vmatprep.subr.mxu0 0.0
      %v1315 = vand.u32 %v463, 4294901760
      %v1316 = vsub.f32 %v463, %v1315
      %v1317 = vand.u32 %v1316, 4294901760
      %v1318 = vsub.f32 %v1316, %v1317
      %v1319 = vand.u32 %v1318, 4294901760
      %1320 = vmatpush1.msra.mxu0 %v1319
      %1321 = vmatprep.subr.mxu0 0.0
      %v1322 = vand.u32 %v464, 4294901760
      %v1323 = vsub.f32 %v464, %v1322
      %v1324 = vand.u32 %v1323, 4294901760
      %v1325 = vsub.f32 %v1323, %v1324
      %v1326 = vand.u32 %v1325, 4294901760
      %1327 = vmatpush1.msra.mxu0 %v1326
      %1328 = vmatprep.subr.mxu0 0.0
      %1329 = vmatpush1.msra.mxu0 0.0
      %1330 = vmatprep.subr.mxu0 0.0
      %1331 = vmatpush1.msra.mxu0 0.0
      %1332 = vmatprep.subr.mxu0 0.0
      %1333 = vmatpush1.msra.mxu0 0.0
      %1334 = vmatprep.subr.mxu0 0.0
      %1335 = vmatpush1.msra.mxu0 0.0
      %1336 = vmatprep.subr.mxu0 0.0
      %1337 = vmatpush1.msra.mxu0 0.0
      %1338 = vmatprep.subr.mxu0 0.0
      %1339 = vmatpush1.msra.mxu0 0.0
      %1340 = vmatprep.subr.mxu0 0.0
      %1341 = vmatpush1.msra.mxu0 0.0
      %1342 = vmatprep.subr.mxu0 0.0
      %1343 = vmatpush1.msra.mxu0 0.0
      %1344 = vmatprep.subr.mxu0 0.0
      %1345 = vmatpush1.msra.mxu0 0.0
      %1346 = vmatprep.subr.mxu0 0.0
      %1347 = vmatpush1.msra.mxu0 0.0
      %1348 = vmatprep.subr.mxu0 0.0
      %1349 = vmatpush1.msra.mxu0 0.0
      %1350 = vmatprep.subr.mxu0 0.0
      %1351 = vmatpush1.msra.mxu0 0.0
      %1352 = vmatprep.subr.mxu0 0.0
      %1353 = vmatpush1.msra.mxu0 0.0
      %1354 = vmatprep.subr.mxu0 0.0
      %1355 = vmatpush1.msra.mxu0 0.0
      %1356 = vmatprep.subr.mxu0 0.0
      %1357 = vmatpush1.msra.mxu0 0.0
      %1358 = vmatprep.subr.mxu0 0.0
      %1359 = vmatpush1.msra.mxu0 0.0
      %1360 = vmatprep.subr.mxu0 0.0
      %1361 = vmatpush1.msra.mxu0 0.0
      %1362 = vmatprep.subr.mxu0 0.0
      %1363 = vmatpush1.msra.mxu0 0.0
      %1364 = vmatprep.subr.mxu0 0.0
      %1365 = vmatpush1.msra.mxu0 0.0
      %1366 = vmatprep.subr.mxu0 0.0
      %1367 = vmatpush1.msra.mxu0 0.0
      %1368 = vmatprep.subr.mxu0 0.0
      %1369 = vmatpush1.msra.mxu0 0.0
      %1370 = vmatprep.subr.mxu0 0.0
      %1371 = vmatpush1.msra.mxu0 0.0
      %1372 = vmatprep.subr.mxu0 0.0
      %1373 = vmatpush1.msra.mxu0 0.0
      %1374 = vmatprep.subr.mxu0 0.0
      %1375 = vmatpush1.msra.mxu0 0.0
      %1376 = vmatprep.subr.mxu0 0.0
      %1377 = vmatpush1.msra.mxu0 0.0
      %1378 = vmatprep.subr.mxu0 0.0
      %1379 = vmatpush1.msra.mxu0 0.0
      %1380 = vmatprep.subr.mxu0 0.0
      %1381 = vmatpush1.msra.mxu0 0.0
      %1382 = vmatprep.subr.mxu0 0.0
      %1383 = vmatpush1.msra.mxu0 0.0
      %1384 = vmatprep.mubr.f32.mxu0 0.0
      %v1385 = vand.u32 %v1206, 4294901760
      %1386 = vmatmul.mubr.f32.gmra.mrb[0].mxu0 %v1385
      %v1387 = vpop.f32.mrb[0].mxu0
      %v1388 = vadd.f32 %v1287, %v1387
      %v1389 = vpop.f32.mrb[0].mxu0
      %1390 = vmatprep.mubr.f32.mxu0 0.0
      %v1391 = vand.u32 %v1209, 4294901760
      %1392 = vmatmul.mubr.f32.gmra.mrb[0].mxu0 %v1391
      %v1393 = vpop.f32.mrb[0].mxu0
      %v1394 = vadd.f32 %v1297, %v1393
      %v1395 = vpop.f32.mrb[0].mxu0
      %1396 = vdwg.mxu0
      %1397 = vmatprep.subr.mxu0 0.0
      %v1398 = vand.u32 %v461, 4294901760
      %v1399 = vsub.f32 %v461, %v1398
      %1400 = vmatpush1.msra.mxu0 %v1399
      %1401 = vmatprep.subr.mxu0 0.0
      %v1402 = vand.u32 %v462, 4294901760
      %v1403 = vsub.f32 %v462, %v1402
      %1404 = vmatpush1.msra.mxu0 %v1403
      %1405 = vmatprep.subr.mxu0 0.0
      %v1406 = vand.u32 %v463, 4294901760
      %v1407 = vsub.f32 %v463, %v1406
      %1408 = vmatpush1.msra.mxu0 %v1407
      %1409 = vmatprep.subr.mxu0 0.0
      %v1410 = vand.u32 %v464, 4294901760
      %v1411 = vsub.f32 %v464, %v1410
      %1412 = vmatpush1.msra.mxu0 %v1411
      %1413 = vmatprep.subr.mxu0 0.0
      %1414 = vmatpush1.msra.mxu0 0.0
      %1415 = vmatprep.subr.mxu0 0.0
      %1416 = vmatpush1.msra.mxu0 0.0
      %1417 = vmatprep.subr.mxu0 0.0
      %1418 = vmatpush1.msra.mxu0 0.0
      %1419 = vmatprep.subr.mxu0 0.0
      %1420 = vmatpush1.msra.mxu0 0.0
      %1421 = vmatprep.subr.mxu0 0.0
      %1422 = vmatpush1.msra.mxu0 0.0
      %1423 = vmatprep.subr.mxu0 0.0
      %1424 = vmatpush1.msra.mxu0 0.0
      %1425 = vmatprep.subr.mxu0 0.0
      %1426 = vmatpush1.msra.mxu0 0.0
      %1427 = vmatprep.subr.mxu0 0.0
      %1428 = vmatpush1.msra.mxu0 0.0
      %1429 = vmatprep.subr.mxu0 0.0
      %1430 = vmatpush1.msra.mxu0 0.0
      %1431 = vmatprep.subr.mxu0 0.0
      %1432 = vmatpush1.msra.mxu0 0.0
      %1433 = vmatprep.subr.mxu0 0.0
      %1434 = vmatpush1.msra.mxu0 0.0
      %1435 = vmatprep.subr.mxu0 0.0
      %1436 = vmatpush1.msra.mxu0 0.0
      %1437 = vmatprep.subr.mxu0 0.0
      %1438 = vmatpush1.msra.mxu0 0.0
      %1439 = vmatprep.subr.mxu0 0.0
      %1440 = vmatpush1.msra.mxu0 0.0
      %1441 = vmatprep.subr.mxu0 0.0
      %1442 = vmatpush1.msra.mxu0 0.0
      %1443 = vmatprep.subr.mxu0 0.0
      %1444 = vmatpush1.msra.mxu0 0.0
      %1445 = vmatprep.subr.mxu0 0.0
      %1446 = vmatpush1.msra.mxu0 0.0
      %1447 = vmatprep.subr.mxu0 0.0
      %1448 = vmatpush1.msra.mxu0 0.0
      %1449 = vmatprep.subr.mxu0 0.0
      %1450 = vmatpush1.msra.mxu0 0.0
      %1451 = vmatprep.subr.mxu0 0.0
      %1452 = vmatpush1.msra.mxu0 0.0
      %1453 = vmatprep.subr.mxu0 0.0
      %1454 = vmatpush1.msra.mxu0 0.0
      %1455 = vmatprep.subr.mxu0 0.0
      %1456 = vmatpush1.msra.mxu0 0.0
      %1457 = vmatprep.subr.mxu0 0.0
      %1458 = vmatpush1.msra.mxu0 0.0
      %1459 = vmatprep.subr.mxu0 0.0
      %1460 = vmatpush1.msra.mxu0 0.0
      %1461 = vmatprep.subr.mxu0 0.0
      %1462 = vmatpush1.msra.mxu0 0.0
      %1463 = vmatprep.subr.mxu0 0.0
      %1464 = vmatpush1.msra.mxu0 0.0
      %1465 = vmatprep.subr.mxu0 0.0
      %1466 = vmatpush1.msra.mxu0 0.0
      %1467 = vmatprep.subr.mxu0 0.0
      %1468 = vmatpush1.msra.mxu0 0.0
      %1469 = vmatprep.mubr.f32.mxu0 0.0
      %v1470 = vand.u32 %v1206, 4294901760
      %v1471 = vsub.f32 %v1206, %v1470
      %1472 = vmatmul.mubr.f32.gmra.mrb[0].mxu0 %v1471
      %v1473 = vpop.f32.mrb[0].mxu0
      %v1474 = vadd.f32 %v1388, %v1473
      %v1475 = vpop.f32.mrb[0].mxu0
      %1476 = vmatprep.mubr.f32.mxu0 0.0
      %v1477 = vand.u32 %v1209, 4294901760
      %v1478 = vsub.f32 %v1209, %v1477
      %1479 = vmatmul.mubr.f32.gmra.mrb[0].mxu0 %v1478
      %v1480 = vpop.f32.mrb[0].mxu0
      %v1481 = vadd.f32 %v1394, %v1480
      %v1482 = vpop.f32.mrb[0].mxu0
      %1483 = vdwg.mxu0
      %1484 = vmatprep.subr.mxu0 0.0
      %v1485 = vand.u32 %v461, 4294901760
      %1486 = vmatpush1.msra.mxu0 %v1485
      %1487 = vmatprep.subr.mxu0 0.0
      %v1488 = vand.u32 %v462, 4294901760
      %1489 = vmatpush1.msra.mxu0 %v1488
      %1490 = vmatprep.subr.mxu0 0.0
      %v1491 = vand.u32 %v463, 4294901760
      %1492 = vmatpush1.msra.mxu0 %v1491
      %1493 = vmatprep.subr.mxu0 0.0
      %v1494 = vand.u32 %v464, 4294901760
      %1495 = vmatpush1.msra.mxu0 %v1494
      %1496 = vmatprep.subr.mxu0 0.0
      %1497 = vmatpush1.msra.mxu0 0.0
      %1498 = vmatprep.subr.mxu0 0.0
      %1499 = vmatpush1.msra.mxu0 0.0
      %1500 = vmatprep.subr.mxu0 0.0
      %1501 = vmatpush1.msra.mxu0 0.0
      %1502 = vmatprep.subr.mxu0 0.0
      %1503 = vmatpush1.msra.mxu0 0.0
      %1504 = vmatprep.subr.mxu0 0.0
      %1505 = vmatpush1.msra.mxu0 0.0
      %1506 = vmatprep.subr.mxu0 0.0
      %1507 = vmatpush1.msra.mxu0 0.0
      %1508 = vmatprep.subr.mxu0 0.0
      %1509 = vmatpush1.msra.mxu0 0.0
      %1510 = vmatprep.subr.mxu0 0.0
      %1511 = vmatpush1.msra.mxu0 0.0
      %1512 = vmatprep.subr.mxu0 0.0
      %1513 = vmatpush1.msra.mxu0 0.0
      %1514 = vmatprep.subr.mxu0 0.0
      %1515 = vmatpush1.msra.mxu0 0.0
      %1516 = vmatprep.subr.mxu0 0.0
      %1517 = vmatpush1.msra.mxu0 0.0
      %1518 = vmatprep.subr.mxu0 0.0
      %1519 = vmatpush1.msra.mxu0 0.0
      %1520 = vmatprep.subr.mxu0 0.0
      %1521 = vmatpush1.msra.mxu0 0.0
      %1522 = vmatprep.subr.mxu0 0.0
      %1523 = vmatpush1.msra.mxu0 0.0
      %1524 = vmatprep.subr.mxu0 0.0
      %1525 = vmatpush1.msra.mxu0 0.0
      %1526 = vmatprep.subr.mxu0 0.0
      %1527 = vmatpush1.msra.mxu0 0.0
      %1528 = vmatprep.subr.mxu0 0.0
      %1529 = vmatpush1.msra.mxu0 0.0
      %1530 = vmatprep.subr.mxu0 0.0
      %1531 = vmatpush1.msra.mxu0 0.0
      %1532 = vmatprep.subr.mxu0 0.0
      %1533 = vmatpush1.msra.mxu0 0.0
      %1534 = vmatprep.subr.mxu0 0.0
      %1535 = vmatpush1.msra.mxu0 0.0
      %1536 = vmatprep.subr.mxu0 0.0
      %1537 = vmatpush1.msra.mxu0 0.0
      %1538 = vmatprep.subr.mxu0 0.0
      %1539 = vmatpush1.msra.mxu0 0.0
      %1540 = vmatprep.subr.mxu0 0.0
      %1541 = vmatpush1.msra.mxu0 0.0
      %1542 = vmatprep.subr.mxu0 0.0
      %1543 = vmatpush1.msra.mxu0 0.0
      %1544 = vmatprep.subr.mxu0 0.0
      %1545 = vmatpush1.msra.mxu0 0.0
      %1546 = vmatprep.subr.mxu0 0.0
      %1547 = vmatpush1.msra.mxu0 0.0
      %1548 = vmatprep.subr.mxu0 0.0
      %1549 = vmatpush1.msra.mxu0 0.0
      %1550 = vmatprep.subr.mxu0 0.0
      %1551 = vmatpush1.msra.mxu0 0.0
      %1552 = vmatprep.mubr.f32.mxu0 0.0
      %v1553 = vand.u32 %v1206, 4294901760
      %v1554 = vsub.f32 %v1206, %v1553
      %v1555 = vand.u32 %v1554, 4294901760
      %1556 = vmatmul.mubr.f32.gmra.mrb[0].mxu0 %v1555
      %v1557 = vpop.f32.mrb[0].mxu0
      %v1558 = vadd.f32 %v1474, %v1557
      %v1559 = vpop.f32.mrb[0].mxu0
      %1560 = vmatprep.mubr.f32.mxu0 0.0
      %v1561 = vand.u32 %v1209, 4294901760
      %v1562 = vsub.f32 %v1209, %v1561
      %v1563 = vand.u32 %v1562, 4294901760
      %1564 = vmatmul.mubr.f32.gmra.mrb[0].mxu0 %v1563
      %v1565 = vpop.f32.mrb[0].mxu0
      %v1566 = vadd.f32 %v1481, %v1565
      %v1567 = vpop.f32.mrb[0].mxu0
      %1568 = vdwg.mxu0
      %1569 = vmatprep.subr.mxu0 0.0
      %v1570 = vand.u32 %v461, 4294901760
      %v1571 = vsub.f32 %v461, %v1570
      %v1572 = vand.u32 %v1571, 4294901760
      %1573 = vmatpush1.msra.mxu0 %v1572
      %1574 = vmatprep.subr.mxu0 0.0
      %v1575 = vand.u32 %v462, 4294901760
      %v1576 = vsub.f32 %v462, %v1575
      %v1577 = vand.u32 %v1576, 4294901760
      %1578 = vmatpush1.msra.mxu0 %v1577
      %1579 = vmatprep.subr.mxu0 0.0
      %v1580 = vand.u32 %v463, 4294901760
      %v1581 = vsub.f32 %v463, %v1580
      %v1582 = vand.u32 %v1581, 4294901760
      %1583 = vmatpush1.msra.mxu0 %v1582
      %1584 = vmatprep.subr.mxu0 0.0
      %v1585 = vand.u32 %v464, 4294901760
      %v1586 = vsub.f32 %v464, %v1585
      %v1587 = vand.u32 %v1586, 4294901760
      %1588 = vmatpush1.msra.mxu0 %v1587
      %1589 = vmatprep.subr.mxu0 0.0
      %1590 = vmatpush1.msra.mxu0 0.0
      %1591 = vmatprep.subr.mxu0 0.0
      %1592 = vmatpush1.msra.mxu0 0.0
      %1593 = vmatprep.subr.mxu0 0.0
      %1594 = vmatpush1.msra.mxu0 0.0
      %1595 = vmatprep.subr.mxu0 0.0
      %1596 = vmatpush1.msra.mxu0 0.0
      %1597 = vmatprep.subr.mxu0 0.0
      %1598 = vmatpush1.msra.mxu0 0.0
      %1599 = vmatprep.subr.mxu0 0.0
      %1600 = vmatpush1.msra.mxu0 0.0
      %1601 = vmatprep.subr.mxu0 0.0
      %1602 = vmatpush1.msra.mxu0 0.0
      %1603 = vmatprep.subr.mxu0 0.0
      %1604 = vmatpush1.msra.mxu0 0.0
      %1605 = vmatprep.subr.mxu0 0.0
      %1606 = vmatpush1.msra.mxu0 0.0
      %1607 = vmatprep.subr.mxu0 0.0
      %1608 = vmatpush1.msra.mxu0 0.0
      %1609 = vmatprep.subr.mxu0 0.0
      %1610 = vmatpush1.msra.mxu0 0.0
      %1611 = vmatprep.subr.mxu0 0.0
      %1612 = vmatpush1.msra.mxu0 0.0
      %1613 = vmatprep.subr.mxu0 0.0
      %1614 = vmatpush1.msra.mxu0 0.0
      %1615 = vmatprep.subr.mxu0 0.0
      %1616 = vmatpush1.msra.mxu0 0.0
      %1617 = vmatprep.subr.mxu0 0.0
      %1618 = vmatpush1.msra.mxu0 0.0
      %1619 = vmatprep.subr.mxu0 0.0
      %1620 = vmatpush1.msra.mxu0 0.0
      %1621 = vmatprep.subr.mxu0 0.0
      %1622 = vmatpush1.msra.mxu0 0.0
      %1623 = vmatprep.subr.mxu0 0.0
      %1624 = vmatpush1.msra.mxu0 0.0
      %1625 = vmatprep.subr.mxu0 0.0
      %1626 = vmatpush1.msra.mxu0 0.0
      %1627 = vmatprep.subr.mxu0 0.0
      %1628 = vmatpush1.msra.mxu0 0.0
      %1629 = vmatprep.subr.mxu0 0.0
      %1630 = vmatpush1.msra.mxu0 0.0
      %1631 = vmatprep.subr.mxu0 0.0
      %1632 = vmatpush1.msra.mxu0 0.0
      %1633 = vmatprep.subr.mxu0 0.0
      %1634 = vmatpush1.msra.mxu0 0.0
      %1635 = vmatprep.subr.mxu0 0.0
      %1636 = vmatpush1.msra.mxu0 0.0
      %1637 = vmatprep.subr.mxu0 0.0
      %1638 = vmatpush1.msra.mxu0 0.0
      %1639 = vmatprep.subr.mxu0 0.0
      %1640 = vmatpush1.msra.mxu0 0.0
      %1641 = vmatprep.subr.mxu0 0.0
      %1642 = vmatpush1.msra.mxu0 0.0
      %1643 = vmatprep.subr.mxu0 0.0
      %1644 = vmatpush1.msra.mxu0 0.0
      %1645 = vmatprep.mubr.f32.mxu0 0.0
      %v1646 = vand.u32 %v1206, 4294901760
      %1647 = vmatmul.mubr.f32.gmra.mrb[0].mxu0 %v1646
      %v1648 = vpop.f32.mrb[0].mxu0
      %v1649 = vadd.f32 %v1558, %v1648
      %v1650 = vpop.f32.mrb[0].mxu0
      %1651 = vmatprep.mubr.f32.mxu0 0.0
      %v1652 = vand.u32 %v1209, 4294901760
      %1653 = vmatmul.mubr.f32.gmra.mrb[0].mxu0 %v1652
      %v1654 = vpop.f32.mrb[0].mxu0
      %v1655 = vadd.f32 %v1566, %v1654
      %v1656 = vpop.f32.mrb[0].mxu0
      %1657 = vdwg.mxu0
      %1658 = vmatprep.subr.mxu0 0.0
      %v1659 = vand.u32 %v461, 4294901760
      %1660 = vmatpush1.msra.mxu0 %v1659
      %1661 = vmatprep.subr.mxu0 0.0
      %v1662 = vand.u32 %v462, 4294901760
      %1663 = vmatpush1.msra.mxu0 %v1662
      %1664 = vmatprep.subr.mxu0 0.0
      %v1665 = vand.u32 %v463, 4294901760
      %1666 = vmatpush1.msra.mxu0 %v1665
      %1667 = vmatprep.subr.mxu0 0.0
      %v1668 = vand.u32 %v464, 4294901760
      %1669 = vmatpush1.msra.mxu0 %v1668
      %1670 = vmatprep.subr.mxu0 0.0
      %1671 = vmatpush1.msra.mxu0 0.0
      %1672 = vmatprep.subr.mxu0 0.0
      %1673 = vmatpush1.msra.mxu0 0.0
      %1674 = vmatprep.subr.mxu0 0.0
      %1675 = vmatpush1.msra.mxu0 0.0
      %1676 = vmatprep.subr.mxu0 0.0
      %1677 = vmatpush1.msra.mxu0 0.0
      %1678 = vmatprep.subr.mxu0 0.0
      %1679 = vmatpush1.msra.mxu0 0.0
      %1680 = vmatprep.subr.mxu0 0.0
      %1681 = vmatpush1.msra.mxu0 0.0
      %1682 = vmatprep.subr.mxu0 0.0
      %1683 = vmatpush1.msra.mxu0 0.0
      %1684 = vmatprep.subr.mxu0 0.0
      %1685 = vmatpush1.msra.mxu0 0.0
      %1686 = vmatprep.subr.mxu0 0.0
      %1687 = vmatpush1.msra.mxu0 0.0
      %1688 = vmatprep.subr.mxu0 0.0
      %1689 = vmatpush1.msra.mxu0 0.0
      %1690 = vmatprep.subr.mxu0 0.0
      %1691 = vmatpush1.msra.mxu0 0.0
      %1692 = vmatprep.subr.mxu0 0.0
      %1693 = vmatpush1.msra.mxu0 0.0
      %1694 = vmatprep.subr.mxu0 0.0
      %1695 = vmatpush1.msra.mxu0 0.0
      %1696 = vmatprep.subr.mxu0 0.0
      %1697 = vmatpush1.msra.mxu0 0.0
      %1698 = vmatprep.subr.mxu0 0.0
      %1699 = vmatpush1.msra.mxu0 0.0
      %1700 = vmatprep.subr.mxu0 0.0
      %1701 = vmatpush1.msra.mxu0 0.0
      %1702 = vmatprep.subr.mxu0 0.0
      %1703 = vmatpush1.msra.mxu0 0.0
      %1704 = vmatprep.subr.mxu0 0.0
      %1705 = vmatpush1.msra.mxu0 0.0
      %1706 = vmatprep.subr.mxu0 0.0
      %1707 = vmatpush1.msra.mxu0 0.0
      %1708 = vmatprep.subr.mxu0 0.0
      %1709 = vmatpush1.msra.mxu0 0.0
      %1710 = vmatprep.subr.mxu0 0.0
      %1711 = vmatpush1.msra.mxu0 0.0
      %1712 = vmatprep.subr.mxu0 0.0
      %1713 = vmatpush1.msra.mxu0 0.0
      %1714 = vmatprep.subr.mxu0 0.0
      %1715 = vmatpush1.msra.mxu0 0.0
      %1716 = vmatprep.subr.mxu0 0.0
      %1717 = vmatpush1.msra.mxu0 0.0
      %1718 = vmatprep.subr.mxu0 0.0
      %1719 = vmatpush1.msra.mxu0 0.0
      %1720 = vmatprep.subr.mxu0 0.0
      %1721 = vmatpush1.msra.mxu0 0.0
      %1722 = vmatprep.subr.mxu0 0.0
      %1723 = vmatpush1.msra.mxu0 0.0
      %1724 = vmatprep.subr.mxu0 0.0
      %1725 = vmatpush1.msra.mxu0 0.0
      %1726 = vmatprep.mubr.f32.mxu0 0.0
      %v1727 = vand.u32 %v1206, 4294901760
      %1728 = vmatmul.mubr.f32.gmra.mrb[0].mxu0 %v1727
      %v1729 = vpop.f32.mrb[0].mxu0
      %v1730 = vadd.f32 %v1649, %v1729
      %v1731 = vpop.f32.mrb[0].mxu0
      %1732 = vmatprep.mubr.f32.mxu0 0.0
      %v1733 = vand.u32 %v1209, 4294901760
      %1734 = vmatmul.mubr.f32.gmra.mrb[0].mxu0 %v1733
      %v1735 = vpop.f32.mrb[0].mxu0
      %v1736 = vadd.f32 %v1655, %v1735
      %v1737 = vpop.f32.mrb[0].mxu0
      %1738 = vdwg.mxu0
      %vm1739 = vcmp.gt.f32.partialorder %v1730, 20.0
      %vm1740 = vcmp.gt.f32.partialorder %v1736, 20.0
      %v1741 = vmin.f32 %v1730, 20.0
      %v1742 = vmin.f32 %v1736, 20.0
      %v1743 = vmul.f32 %v1741, 1.442695
      %v1744 = vpow.pop %v1743
      %v1745 = vmul.f32 %v1742, 1.442695
      %v1746 = vpow.pop %v1745
      %v1747 = vadd.f32 %v1744, 1.0
      %v1748 = vadd.f32 %v1746, 1.0
      %v1749 = vlog2.pop %v1747
      %v1750 = vmul.f32 %v1749, 0.6931472
      %v1751 = vlog2.pop %v1748
      %v1752 = vmul.f32 %v1751, 0.6931472
      %v1753 = vsel %vm1739, %v1730, %v1750
      %v1754 = vsel %vm1740, %v1736, %v1752
      %v1755 = vsel %vm323, %v1753, 0.0
      %v1756 = vsel %vm323, %v1754, 0.0
      %v1757 = vadd.f32 %v1755, %v1756
      %v1758 = vrot.slane %v1757, 4
      %v1759 = vadd.f32 %v1757, %v1758
      %v1760 = vrot.slane %v1759, 2
      %v1761 = vadd.f32 %v1759, %v1760
      %v1762 = vrot.slane %v1761, 1
      %v1763 = vadd.f32 %v1761, %v1762
      %v1764 = vmul.f32 %v1763, %v1169
      %v1765 = vsub.f32 %v1753, %v1764
      %v1766 = vsub.f32 %v1754, %v1764
      %v1767 = vmul.f32 %v1765, %v1765
      %v1768 = vmul.f32 %v1766, %v1766
      %v1769 = vsel %vm323, %v1767, 0.0
      %v1770 = vsel %vm323, %v1768, 0.0
      %v1771 = vadd.f32 %v1769, %v1770
      %v1772 = vrot.slane %v1771, 4
      %v1773 = vadd.f32 %v1771, %v1772
      %v1774 = vrot.slane %v1773, 2
      %v1775 = vadd.f32 %v1773, %v1774
      %v1776 = vrot.slane %v1775, 1
      %v1777 = vadd.f32 %v1775, %v1776
      %v1778 = vmul.f32 %v1777, %v1169
      %v1779 = vlaneseq
      %v1780 = vshrl.u32 %v1779, 7
      %v1781 = vsub.s32 0, %v1780
      %v1782 = vrot.slane %v473, %v1781
      %v1783 = vmul.f32 %v1782, %v1765
      %v1784 = vmul.f32 %v1782, %v1766
      %v1785 = vadd.f32 %v1778, 1e-05
      %v1786 = vrsqrt.pop %v1785
      %v1787 = vmul.f32 %v1783, %v1786
      %v1788 = vmul.f32 %v1784, %v1786
      %v1789 = vlaneseq
      %v1790 = vshrl.u32 %v1789, 7
      %v1791 = vsub.s32 0, %v1790
      %v1792 = vrot.slane %v474, %v1791
      %v1793 = vadd.f32 %v1787, %v1792
      %v1794 = vadd.f32 %v1788, %v1792
      %v1795 = vlaneseq
      %v1796 = vshrl.u32 %v1795, 7
      %v1797 = vsub.s32 0, %v1796
      %v1798 = vrot.slane %v475, %v1797
      %v1800 = vsel %vm323, %v1793, 0
      %v1803 = vsel %vm323, %v1794, 0
      %1805 = vmatprep.subr.mxu0 0.0
      %v1806 = vand.u32 %v465, 4294901760
      %1807 = vmatpush1.msra.mxu0 %v1806
      %1808 = vmatprep.subr.mxu0 0.0
      %v1809 = vand.u32 %v466, 4294901760
      %1810 = vmatpush1.msra.mxu0 %v1809
      %1811 = vmatprep.subr.mxu0 0.0
      %v1812 = vand.u32 %v467, 4294901760
      %1813 = vmatpush1.msra.mxu0 %v1812
      %1814 = vmatprep.subr.mxu0 0.0
      %v1815 = vand.u32 %v468, 4294901760
      %1816 = vmatpush1.msra.mxu0 %v1815
      %1817 = vmatprep.subr.mxu0 0.0
      %1818 = vmatpush1.msra.mxu0 0.0
      %1819 = vmatprep.subr.mxu0 0.0
      %1820 = vmatpush1.msra.mxu0 0.0
      %1821 = vmatprep.subr.mxu0 0.0
      %1822 = vmatpush1.msra.mxu0 0.0
      %1823 = vmatprep.subr.mxu0 0.0
      %1824 = vmatpush1.msra.mxu0 0.0
      %1825 = vmatprep.subr.mxu0 0.0
      %1826 = vmatpush1.msra.mxu0 0.0
      %1827 = vmatprep.subr.mxu0 0.0
      %1828 = vmatpush1.msra.mxu0 0.0
      %1829 = vmatprep.subr.mxu0 0.0
      %1830 = vmatpush1.msra.mxu0 0.0
      %1831 = vmatprep.subr.mxu0 0.0
      %1832 = vmatpush1.msra.mxu0 0.0
      %1833 = vmatprep.subr.mxu0 0.0
      %1834 = vmatpush1.msra.mxu0 0.0
      %1835 = vmatprep.subr.mxu0 0.0
      %1836 = vmatpush1.msra.mxu0 0.0
      %1837 = vmatprep.subr.mxu0 0.0
      %1838 = vmatpush1.msra.mxu0 0.0
      %1839 = vmatprep.subr.mxu0 0.0
      %1840 = vmatpush1.msra.mxu0 0.0
      %1841 = vmatprep.subr.mxu0 0.0
      %1842 = vmatpush1.msra.mxu0 0.0
      %1843 = vmatprep.subr.mxu0 0.0
      %1844 = vmatpush1.msra.mxu0 0.0
      %1845 = vmatprep.subr.mxu0 0.0
      %1846 = vmatpush1.msra.mxu0 0.0
      %1847 = vmatprep.subr.mxu0 0.0
      %1848 = vmatpush1.msra.mxu0 0.0
      %1849 = vmatprep.subr.mxu0 0.0
      %1850 = vmatpush1.msra.mxu0 0.0
      %1851 = vmatprep.subr.mxu0 0.0
      %1852 = vmatpush1.msra.mxu0 0.0
      %1853 = vmatprep.subr.mxu0 0.0
      %1854 = vmatpush1.msra.mxu0 0.0
      %1855 = vmatprep.subr.mxu0 0.0
      %1856 = vmatpush1.msra.mxu0 0.0
      %1857 = vmatprep.subr.mxu0 0.0
      %1858 = vmatpush1.msra.mxu0 0.0
      %1859 = vmatprep.subr.mxu0 0.0
      %1860 = vmatpush1.msra.mxu0 0.0
      %1861 = vmatprep.subr.mxu0 0.0
      %1862 = vmatpush1.msra.mxu0 0.0
      %1863 = vmatprep.subr.mxu0 0.0
      %1864 = vmatpush1.msra.mxu0 0.0
      %1865 = vmatprep.subr.mxu0 0.0
      %1866 = vmatpush1.msra.mxu0 0.0
      %1867 = vmatprep.subr.mxu0 0.0
      %1868 = vmatpush1.msra.mxu0 0.0
      %1869 = vmatprep.subr.mxu0 0.0
      %1870 = vmatpush1.msra.mxu0 0.0
      %1871 = vmatprep.subr.mxu0 0.0
      %1872 = vmatpush1.msra.mxu0 0.0
      %1873 = vmatprep.mubr.f32.mxu0 0.0
      %v1874 = vand.u32 %v1800, 4294901760
      %v1875 = vsub.f32 %v1800, %v1874
      %v1876 = vand.u32 %v1875, 4294901760
      %v1877 = vsub.f32 %v1875, %v1876
      %v1878 = vand.u32 %v1877, 4294901760
      %1879 = vmatmul.mubr.f32.gmra.mrb[0].mxu0 %v1878
      %v1880 = vpop.f32.mrb[0].mxu0
      %v1881 = vadd.f32 %v1798, %v1880
      %v1882 = vpop.f32.mrb[0].mxu0
      %1883 = vmatprep.mubr.f32.mxu0 0.0
      %v1884 = vand.u32 %v1803, 4294901760
      %v1885 = vsub.f32 %v1803, %v1884
      %v1886 = vand.u32 %v1885, 4294901760
      %v1887 = vsub.f32 %v1885, %v1886
      %v1888 = vand.u32 %v1887, 4294901760
      %1889 = vmatmul.mubr.f32.gmra.mrb[0].mxu0 %v1888
      %v1890 = vpop.f32.mrb[0].mxu0
      %v1891 = vadd.f32 %v1798, %v1890
      %v1892 = vpop.f32.mrb[0].mxu0
      %1893 = vdwg.mxu0
      %1894 = vmatprep.subr.mxu0 0.0
      %v1895 = vand.u32 %v465, 4294901760
      %v1896 = vsub.f32 %v465, %v1895
      %v1897 = vand.u32 %v1896, 4294901760
      %v1898 = vsub.f32 %v1896, %v1897
      %v1899 = vand.u32 %v1898, 4294901760
      %1900 = vmatpush1.msra.mxu0 %v1899
      %1901 = vmatprep.subr.mxu0 0.0
      %v1902 = vand.u32 %v466, 4294901760
      %v1903 = vsub.f32 %v466, %v1902
      %v1904 = vand.u32 %v1903, 4294901760
      %v1905 = vsub.f32 %v1903, %v1904
      %v1906 = vand.u32 %v1905, 4294901760
      %1907 = vmatpush1.msra.mxu0 %v1906
      %1908 = vmatprep.subr.mxu0 0.0
      %v1909 = vand.u32 %v467, 4294901760
      %v1910 = vsub.f32 %v467, %v1909
      %v1911 = vand.u32 %v1910, 4294901760
      %v1912 = vsub.f32 %v1910, %v1911
      %v1913 = vand.u32 %v1912, 4294901760
      %1914 = vmatpush1.msra.mxu0 %v1913
      %1915 = vmatprep.subr.mxu0 0.0
      %v1916 = vand.u32 %v468, 4294901760
      %v1917 = vsub.f32 %v468, %v1916
      %v1918 = vand.u32 %v1917, 4294901760
      %v1919 = vsub.f32 %v1917, %v1918
      %v1920 = vand.u32 %v1919, 4294901760
      %1921 = vmatpush1.msra.mxu0 %v1920
      %1922 = vmatprep.subr.mxu0 0.0
      %1923 = vmatpush1.msra.mxu0 0.0
      %1924 = vmatprep.subr.mxu0 0.0
      %1925 = vmatpush1.msra.mxu0 0.0
      %1926 = vmatprep.subr.mxu0 0.0
      %1927 = vmatpush1.msra.mxu0 0.0
      %1928 = vmatprep.subr.mxu0 0.0
      %1929 = vmatpush1.msra.mxu0 0.0
      %1930 = vmatprep.subr.mxu0 0.0
      %1931 = vmatpush1.msra.mxu0 0.0
      %1932 = vmatprep.subr.mxu0 0.0
      %1933 = vmatpush1.msra.mxu0 0.0
      %1934 = vmatprep.subr.mxu0 0.0
      %1935 = vmatpush1.msra.mxu0 0.0
      %1936 = vmatprep.subr.mxu0 0.0
      %1937 = vmatpush1.msra.mxu0 0.0
      %1938 = vmatprep.subr.mxu0 0.0
      %1939 = vmatpush1.msra.mxu0 0.0
      %1940 = vmatprep.subr.mxu0 0.0
      %1941 = vmatpush1.msra.mxu0 0.0
      %1942 = vmatprep.subr.mxu0 0.0
      %1943 = vmatpush1.msra.mxu0 0.0
      %1944 = vmatprep.subr.mxu0 0.0
      %1945 = vmatpush1.msra.mxu0 0.0
      %1946 = vmatprep.subr.mxu0 0.0
      %1947 = vmatpush1.msra.mxu0 0.0
      %1948 = vmatprep.subr.mxu0 0.0
      %1949 = vmatpush1.msra.mxu0 0.0
      %1950 = vmatprep.subr.mxu0 0.0
      %1951 = vmatpush1.msra.mxu0 0.0
      %1952 = vmatprep.subr.mxu0 0.0
      %1953 = vmatpush1.msra.mxu0 0.0
      %1954 = vmatprep.subr.mxu0 0.0
      %1955 = vmatpush1.msra.mxu0 0.0
      %1956 = vmatprep.subr.mxu0 0.0
      %1957 = vmatpush1.msra.mxu0 0.0
      %1958 = vmatprep.subr.mxu0 0.0
      %1959 = vmatpush1.msra.mxu0 0.0
      %1960 = vmatprep.subr.mxu0 0.0
      %1961 = vmatpush1.msra.mxu0 0.0
      %1962 = vmatprep.subr.mxu0 0.0
      %1963 = vmatpush1.msra.mxu0 0.0
      %1964 = vmatprep.subr.mxu0 0.0
      %1965 = vmatpush1.msra.mxu0 0.0
      %1966 = vmatprep.subr.mxu0 0.0
      %1967 = vmatpush1.msra.mxu0 0.0
      %1968 = vmatprep.subr.mxu0 0.0
      %1969 = vmatpush1.msra.mxu0 0.0
      %1970 = vmatprep.subr.mxu0 0.0
      %1971 = vmatpush1.msra.mxu0 0.0
      %1972 = vmatprep.subr.mxu0 0.0
      %1973 = vmatpush1.msra.mxu0 0.0
      %1974 = vmatprep.subr.mxu0 0.0
      %1975 = vmatpush1.msra.mxu0 0.0
      %1976 = vmatprep.subr.mxu0 0.0
      %1977 = vmatpush1.msra.mxu0 0.0
      %1978 = vmatprep.mubr.f32.mxu0 0.0
      %v1979 = vand.u32 %v1800, 4294901760
      %1980 = vmatmul.mubr.f32.gmra.mrb[0].mxu0 %v1979
      %v1981 = vpop.f32.mrb[0].mxu0
      %v1982 = vadd.f32 %v1881, %v1981
      %v1983 = vpop.f32.mrb[0].mxu0
      %1984 = vmatprep.mubr.f32.mxu0 0.0
      %v1985 = vand.u32 %v1803, 4294901760
      %1986 = vmatmul.mubr.f32.gmra.mrb[0].mxu0 %v1985
      %v1987 = vpop.f32.mrb[0].mxu0
      %v1988 = vadd.f32 %v1891, %v1987
      %v1989 = vpop.f32.mrb[0].mxu0
      %1990 = vdwg.mxu0
      %1991 = vmatprep.subr.mxu0 0.0
      %v1992 = vand.u32 %v465, 4294901760
      %v1993 = vsub.f32 %v465, %v1992
      %1994 = vmatpush1.msra.mxu0 %v1993
      %1995 = vmatprep.subr.mxu0 0.0
      %v1996 = vand.u32 %v466, 4294901760
      %v1997 = vsub.f32 %v466, %v1996
      %1998 = vmatpush1.msra.mxu0 %v1997
      %1999 = vmatprep.subr.mxu0 0.0
      %v2000 = vand.u32 %v467, 4294901760
      %v2001 = vsub.f32 %v467, %v2000
      %2002 = vmatpush1.msra.mxu0 %v2001
      %2003 = vmatprep.subr.mxu0 0.0
      %v2004 = vand.u32 %v468, 4294901760
      %v2005 = vsub.f32 %v468, %v2004
      %2006 = vmatpush1.msra.mxu0 %v2005
      %2007 = vmatprep.subr.mxu0 0.0
      %2008 = vmatpush1.msra.mxu0 0.0
      %2009 = vmatprep.subr.mxu0 0.0
      %2010 = vmatpush1.msra.mxu0 0.0
      %2011 = vmatprep.subr.mxu0 0.0
      %2012 = vmatpush1.msra.mxu0 0.0
      %2013 = vmatprep.subr.mxu0 0.0
      %2014 = vmatpush1.msra.mxu0 0.0
      %2015 = vmatprep.subr.mxu0 0.0
      %2016 = vmatpush1.msra.mxu0 0.0
      %2017 = vmatprep.subr.mxu0 0.0
      %2018 = vmatpush1.msra.mxu0 0.0
      %2019 = vmatprep.subr.mxu0 0.0
      %2020 = vmatpush1.msra.mxu0 0.0
      %2021 = vmatprep.subr.mxu0 0.0
      %2022 = vmatpush1.msra.mxu0 0.0
      %2023 = vmatprep.subr.mxu0 0.0
      %2024 = vmatpush1.msra.mxu0 0.0
      %2025 = vmatprep.subr.mxu0 0.0
      %2026 = vmatpush1.msra.mxu0 0.0
      %2027 = vmatprep.subr.mxu0 0.0
      %2028 = vmatpush1.msra.mxu0 0.0
      %2029 = vmatprep.subr.mxu0 0.0
      %2030 = vmatpush1.msra.mxu0 0.0
      %2031 = vmatprep.subr.mxu0 0.0
      %2032 = vmatpush1.msra.mxu0 0.0
      %2033 = vmatprep.subr.mxu0 0.0
      %2034 = vmatpush1.msra.mxu0 0.0
      %2035 = vmatprep.subr.mxu0 0.0
      %2036 = vmatpush1.msra.mxu0 0.0
      %2037 = vmatprep.subr.mxu0 0.0
      %2038 = vmatpush1.msra.mxu0 0.0
      %2039 = vmatprep.subr.mxu0 0.0
      %2040 = vmatpush1.msra.mxu0 0.0
      %2041 = vmatprep.subr.mxu0 0.0
      %2042 = vmatpush1.msra.mxu0 0.0
      %2043 = vmatprep.subr.mxu0 0.0
      %2044 = vmatpush1.msra.mxu0 0.0
      %2045 = vmatprep.subr.mxu0 0.0
      %2046 = vmatpush1.msra.mxu0 0.0
      %2047 = vmatprep.subr.mxu0 0.0
      %2048 = vmatpush1.msra.mxu0 0.0
      %2049 = vmatprep.subr.mxu0 0.0
      %2050 = vmatpush1.msra.mxu0 0.0
      %2051 = vmatprep.subr.mxu0 0.0
      %2052 = vmatpush1.msra.mxu0 0.0
      %2053 = vmatprep.subr.mxu0 0.0
      %2054 = vmatpush1.msra.mxu0 0.0
      %2055 = vmatprep.subr.mxu0 0.0
      %2056 = vmatpush1.msra.mxu0 0.0
      %2057 = vmatprep.subr.mxu0 0.0
      %2058 = vmatpush1.msra.mxu0 0.0
      %2059 = vmatprep.subr.mxu0 0.0
      %2060 = vmatpush1.msra.mxu0 0.0
      %2061 = vmatprep.subr.mxu0 0.0
      %2062 = vmatpush1.msra.mxu0 0.0
      %2063 = vmatprep.mubr.f32.mxu0 0.0
      %v2064 = vand.u32 %v1800, 4294901760
      %v2065 = vsub.f32 %v1800, %v2064
      %2066 = vmatmul.mubr.f32.gmra.mrb[0].mxu0 %v2065
      %v2067 = vpop.f32.mrb[0].mxu0
      %v2068 = vadd.f32 %v1982, %v2067
      %v2069 = vpop.f32.mrb[0].mxu0
      %2070 = vmatprep.mubr.f32.mxu0 0.0
      %v2071 = vand.u32 %v1803, 4294901760
      %v2072 = vsub.f32 %v1803, %v2071
      %2073 = vmatmul.mubr.f32.gmra.mrb[0].mxu0 %v2072
      %v2074 = vpop.f32.mrb[0].mxu0
      %v2075 = vadd.f32 %v1988, %v2074
      %v2076 = vpop.f32.mrb[0].mxu0
      %2077 = vdwg.mxu0
      %2078 = vmatprep.subr.mxu0 0.0
      %v2079 = vand.u32 %v465, 4294901760
      %2080 = vmatpush1.msra.mxu0 %v2079
      %2081 = vmatprep.subr.mxu0 0.0
      %v2082 = vand.u32 %v466, 4294901760
      %2083 = vmatpush1.msra.mxu0 %v2082
      %2084 = vmatprep.subr.mxu0 0.0
      %v2085 = vand.u32 %v467, 4294901760
      %2086 = vmatpush1.msra.mxu0 %v2085
      %2087 = vmatprep.subr.mxu0 0.0
      %v2088 = vand.u32 %v468, 4294901760
      %2089 = vmatpush1.msra.mxu0 %v2088
      %2090 = vmatprep.subr.mxu0 0.0
      %2091 = vmatpush1.msra.mxu0 0.0
      %2092 = vmatprep.subr.mxu0 0.0
      %2093 = vmatpush1.msra.mxu0 0.0
      %2094 = vmatprep.subr.mxu0 0.0
      %2095 = vmatpush1.msra.mxu0 0.0
      %2096 = vmatprep.subr.mxu0 0.0
      %2097 = vmatpush1.msra.mxu0 0.0
      %2098 = vmatprep.subr.mxu0 0.0
      %2099 = vmatpush1.msra.mxu0 0.0
      %2100 = vmatprep.subr.mxu0 0.0
      %2101 = vmatpush1.msra.mxu0 0.0
      %2102 = vmatprep.subr.mxu0 0.0
      %2103 = vmatpush1.msra.mxu0 0.0
      %2104 = vmatprep.subr.mxu0 0.0
      %2105 = vmatpush1.msra.mxu0 0.0
      %2106 = vmatprep.subr.mxu0 0.0
      %2107 = vmatpush1.msra.mxu0 0.0
      %2108 = vmatprep.subr.mxu0 0.0
      %2109 = vmatpush1.msra.mxu0 0.0
      %2110 = vmatprep.subr.mxu0 0.0
      %2111 = vmatpush1.msra.mxu0 0.0
      %2112 = vmatprep.subr.mxu0 0.0
      %2113 = vmatpush1.msra.mxu0 0.0
      %2114 = vmatprep.subr.mxu0 0.0
      %2115 = vmatpush1.msra.mxu0 0.0
      %2116 = vmatprep.subr.mxu0 0.0
      %2117 = vmatpush1.msra.mxu0 0.0
      %2118 = vmatprep.subr.mxu0 0.0
      %2119 = vmatpush1.msra.mxu0 0.0
      %2120 = vmatprep.subr.mxu0 0.0
      %2121 = vmatpush1.msra.mxu0 0.0
      %2122 = vmatprep.subr.mxu0 0.0
      %2123 = vmatpush1.msra.mxu0 0.0
      %2124 = vmatprep.subr.mxu0 0.0
      %2125 = vmatpush1.msra.mxu0 0.0
      %2126 = vmatprep.subr.mxu0 0.0
      %2127 = vmatpush1.msra.mxu0 0.0
      %2128 = vmatprep.subr.mxu0 0.0
      %2129 = vmatpush1.msra.mxu0 0.0
      %2130 = vmatprep.subr.mxu0 0.0
      %2131 = vmatpush1.msra.mxu0 0.0
      %2132 = vmatprep.subr.mxu0 0.0
      %2133 = vmatpush1.msra.mxu0 0.0
      %2134 = vmatprep.subr.mxu0 0.0
      %2135 = vmatpush1.msra.mxu0 0.0
      %2136 = vmatprep.subr.mxu0 0.0
      %2137 = vmatpush1.msra.mxu0 0.0
      %2138 = vmatprep.subr.mxu0 0.0
      %2139 = vmatpush1.msra.mxu0 0.0
      %2140 = vmatprep.subr.mxu0 0.0
      %2141 = vmatpush1.msra.mxu0 0.0
      %2142 = vmatprep.subr.mxu0 0.0
      %2143 = vmatpush1.msra.mxu0 0.0
      %2144 = vmatprep.subr.mxu0 0.0
      %2145 = vmatpush1.msra.mxu0 0.0
      %2146 = vmatprep.mubr.f32.mxu0 0.0
      %v2147 = vand.u32 %v1800, 4294901760
      %v2148 = vsub.f32 %v1800, %v2147
      %v2149 = vand.u32 %v2148, 4294901760
      %2150 = vmatmul.mubr.f32.gmra.mrb[0].mxu0 %v2149
      %v2151 = vpop.f32.mrb[0].mxu0
      %v2152 = vadd.f32 %v2068, %v2151
      %v2153 = vpop.f32.mrb[0].mxu0
      %2154 = vmatprep.mubr.f32.mxu0 0.0
      %v2155 = vand.u32 %v1803, 4294901760
      %v2156 = vsub.f32 %v1803, %v2155
      %v2157 = vand.u32 %v2156, 4294901760
      %2158 = vmatmul.mubr.f32.gmra.mrb[0].mxu0 %v2157
      %v2159 = vpop.f32.mrb[0].mxu0
      %v2160 = vadd.f32 %v2075, %v2159
      %v2161 = vpop.f32.mrb[0].mxu0
      %2162 = vdwg.mxu0
      %2163 = vmatprep.subr.mxu0 0.0
      %v2164 = vand.u32 %v465, 4294901760
      %v2165 = vsub.f32 %v465, %v2164
      %v2166 = vand.u32 %v2165, 4294901760
      %2167 = vmatpush1.msra.mxu0 %v2166
      %2168 = vmatprep.subr.mxu0 0.0
      %v2169 = vand.u32 %v466, 4294901760
      %v2170 = vsub.f32 %v466, %v2169
      %v2171 = vand.u32 %v2170, 4294901760
      %2172 = vmatpush1.msra.mxu0 %v2171
      %2173 = vmatprep.subr.mxu0 0.0
      %v2174 = vand.u32 %v467, 4294901760
      %v2175 = vsub.f32 %v467, %v2174
      %v2176 = vand.u32 %v2175, 4294901760
      %2177 = vmatpush1.msra.mxu0 %v2176
      %2178 = vmatprep.subr.mxu0 0.0
      %v2179 = vand.u32 %v468, 4294901760
      %v2180 = vsub.f32 %v468, %v2179
      %v2181 = vand.u32 %v2180, 4294901760
      %2182 = vmatpush1.msra.mxu0 %v2181
      %2183 = vmatprep.subr.mxu0 0.0
      %2184 = vmatpush1.msra.mxu0 0.0
      %2185 = vmatprep.subr.mxu0 0.0
      %2186 = vmatpush1.msra.mxu0 0.0
      %2187 = vmatprep.subr.mxu0 0.0
      %2188 = vmatpush1.msra.mxu0 0.0
      %2189 = vmatprep.subr.mxu0 0.0
      %2190 = vmatpush1.msra.mxu0 0.0
      %2191 = vmatprep.subr.mxu0 0.0
      %2192 = vmatpush1.msra.mxu0 0.0
      %2193 = vmatprep.subr.mxu0 0.0
      %2194 = vmatpush1.msra.mxu0 0.0
      %2195 = vmatprep.subr.mxu0 0.0
      %2196 = vmatpush1.msra.mxu0 0.0
      %2197 = vmatprep.subr.mxu0 0.0
      %2198 = vmatpush1.msra.mxu0 0.0
      %2199 = vmatprep.subr.mxu0 0.0
      %2200 = vmatpush1.msra.mxu0 0.0
      %2201 = vmatprep.subr.mxu0 0.0
      %2202 = vmatpush1.msra.mxu0 0.0
      %2203 = vmatprep.subr.mxu0 0.0
      %2204 = vmatpush1.msra.mxu0 0.0
      %2205 = vmatprep.subr.mxu0 0.0
      %2206 = vmatpush1.msra.mxu0 0.0
      %2207 = vmatprep.subr.mxu0 0.0
      %2208 = vmatpush1.msra.mxu0 0.0
      %2209 = vmatprep.subr.mxu0 0.0
      %2210 = vmatpush1.msra.mxu0 0.0
      %2211 = vmatprep.subr.mxu0 0.0
      %2212 = vmatpush1.msra.mxu0 0.0
      %2213 = vmatprep.subr.mxu0 0.0
      %2214 = vmatpush1.msra.mxu0 0.0
      %2215 = vmatprep.subr.mxu0 0.0
      %2216 = vmatpush1.msra.mxu0 0.0
      %2217 = vmatprep.subr.mxu0 0.0
      %2218 = vmatpush1.msra.mxu0 0.0
      %2219 = vmatprep.subr.mxu0 0.0
      %2220 = vmatpush1.msra.mxu0 0.0
      %2221 = vmatprep.subr.mxu0 0.0
      %2222 = vmatpush1.msra.mxu0 0.0
      %2223 = vmatprep.subr.mxu0 0.0
      %2224 = vmatpush1.msra.mxu0 0.0
      %2225 = vmatprep.subr.mxu0 0.0
      %2226 = vmatpush1.msra.mxu0 0.0
      %2227 = vmatprep.subr.mxu0 0.0
      %2228 = vmatpush1.msra.mxu0 0.0
      %2229 = vmatprep.subr.mxu0 0.0
      %2230 = vmatpush1.msra.mxu0 0.0
      %2231 = vmatprep.subr.mxu0 0.0
      %2232 = vmatpush1.msra.mxu0 0.0
      %2233 = vmatprep.subr.mxu0 0.0
      %2234 = vmatpush1.msra.mxu0 0.0
      %2235 = vmatprep.subr.mxu0 0.0
      %2236 = vmatpush1.msra.mxu0 0.0
      %2237 = vmatprep.subr.mxu0 0.0
      %2238 = vmatpush1.msra.mxu0 0.0
      %2239 = vmatprep.mubr.f32.mxu0 0.0
      %v2240 = vand.u32 %v1800, 4294901760
      %2241 = vmatmul.mubr.f32.gmra.mrb[0].mxu0 %v2240
      %v2242 = vpop.f32.mrb[0].mxu0
      %v2243 = vadd.f32 %v2152, %v2242
      %v2244 = vpop.f32.mrb[0].mxu0
      %2245 = vmatprep.mubr.f32.mxu0 0.0
      %v2246 = vand.u32 %v1803, 4294901760
      %2247 = vmatmul.mubr.f32.gmra.mrb[0].mxu0 %v2246
      %v2248 = vpop.f32.mrb[0].mxu0
      %v2249 = vadd.f32 %v2160, %v2248
      %v2250 = vpop.f32.mrb[0].mxu0
      %2251 = vdwg.mxu0
      %2252 = vmatprep.subr.mxu0 0.0
      %v2253 = vand.u32 %v465, 4294901760
      %2254 = vmatpush1.msra.mxu0 %v2253
      %2255 = vmatprep.subr.mxu0 0.0
      %v2256 = vand.u32 %v466, 4294901760
      %2257 = vmatpush1.msra.mxu0 %v2256
      %2258 = vmatprep.subr.mxu0 0.0
      %v2259 = vand.u32 %v467, 4294901760
      %2260 = vmatpush1.msra.mxu0 %v2259
      %2261 = vmatprep.subr.mxu0 0.0
      %v2262 = vand.u32 %v468, 4294901760
      %2263 = vmatpush1.msra.mxu0 %v2262
      %2264 = vmatprep.subr.mxu0 0.0
      %2265 = vmatpush1.msra.mxu0 0.0
      %2266 = vmatprep.subr.mxu0 0.0
      %2267 = vmatpush1.msra.mxu0 0.0
      %2268 = vmatprep.subr.mxu0 0.0
      %2269 = vmatpush1.msra.mxu0 0.0
      %2270 = vmatprep.subr.mxu0 0.0
      %2271 = vmatpush1.msra.mxu0 0.0
      %2272 = vmatprep.subr.mxu0 0.0
      %2273 = vmatpush1.msra.mxu0 0.0
      %2274 = vmatprep.subr.mxu0 0.0
      %2275 = vmatpush1.msra.mxu0 0.0
      %2276 = vmatprep.subr.mxu0 0.0
      %2277 = vmatpush1.msra.mxu0 0.0
      %2278 = vmatprep.subr.mxu0 0.0
      %2279 = vmatpush1.msra.mxu0 0.0
      %2280 = vmatprep.subr.mxu0 0.0
      %2281 = vmatpush1.msra.mxu0 0.0
      %2282 = vmatprep.subr.mxu0 0.0
      %2283 = vmatpush1.msra.mxu0 0.0
      %2284 = vmatprep.subr.mxu0 0.0
      %2285 = vmatpush1.msra.mxu0 0.0
      %2286 = vmatprep.subr.mxu0 0.0
      %2287 = vmatpush1.msra.mxu0 0.0
      %2288 = vmatprep.subr.mxu0 0.0
      %2289 = vmatpush1.msra.mxu0 0.0
      %2290 = vmatprep.subr.mxu0 0.0
      %2291 = vmatpush1.msra.mxu0 0.0
      %2292 = vmatprep.subr.mxu0 0.0
      %2293 = vmatpush1.msra.mxu0 0.0
      %2294 = vmatprep.subr.mxu0 0.0
      %2295 = vmatpush1.msra.mxu0 0.0
      %2296 = vmatprep.subr.mxu0 0.0
      %2297 = vmatpush1.msra.mxu0 0.0
      %2298 = vmatprep.subr.mxu0 0.0
      %2299 = vmatpush1.msra.mxu0 0.0
      %2300 = vmatprep.subr.mxu0 0.0
      %2301 = vmatpush1.msra.mxu0 0.0
      %2302 = vmatprep.subr.mxu0 0.0
      %2303 = vmatpush1.msra.mxu0 0.0
      %2304 = vmatprep.subr.mxu0 0.0
      %2305 = vmatpush1.msra.mxu0 0.0
      %2306 = vmatprep.subr.mxu0 0.0
      %2307 = vmatpush1.msra.mxu0 0.0
      %2308 = vmatprep.subr.mxu0 0.0
      %2309 = vmatpush1.msra.mxu0 0.0
      %2310 = vmatprep.subr.mxu0 0.0
      %2311 = vmatpush1.msra.mxu0 0.0
      %2312 = vmatprep.subr.mxu0 0.0
      %2313 = vmatpush1.msra.mxu0 0.0
      %2314 = vmatprep.subr.mxu0 0.0
      %2315 = vmatpush1.msra.mxu0 0.0
      %2316 = vmatprep.subr.mxu0 0.0
      %2317 = vmatpush1.msra.mxu0 0.0
      %2318 = vmatprep.subr.mxu0 0.0
      %2319 = vmatpush1.msra.mxu0 0.0
      %2320 = vmatprep.mubr.f32.mxu0 0.0
      %v2321 = vand.u32 %v1800, 4294901760
      %2322 = vmatmul.mubr.f32.gmra.mrb[0].mxu0 %v2321
      %v2323 = vpop.f32.mrb[0].mxu0
      %v2324 = vadd.f32 %v2243, %v2323
      %v2325 = vpop.f32.mrb[0].mxu0
      %2326 = vmatprep.mubr.f32.mxu0 0.0
      %v2327 = vand.u32 %v1803, 4294901760
      %2328 = vmatmul.mubr.f32.gmra.mrb[0].mxu0 %v2327
      %v2329 = vpop.f32.mrb[0].mxu0
      %v2330 = vadd.f32 %v2249, %v2329
      %v2331 = vpop.f32.mrb[0].mxu0
      %2332 = vdwg.mxu0
      %v2333 = vsel %vm323, %v2324, 0.0
      %v2334 = vsel %vm323, %v2330, 0.0
      %v2335 = vadd.f32 %v2333, %v2334
      %v2336 = vrot.slane %v2335, 4
      %v2337 = vadd.f32 %v2335, %v2336
      %v2338 = vrot.slane %v2337, 2
      %v2339 = vadd.f32 %v2337, %v2338
      %v2340 = vrot.slane %v2339, 1
      %v2341 = vadd.f32 %v2339, %v2340
      %v2342 = vmul.f32 %v2341, %v1169
      %v2343 = vsub.f32 %v2324, %v2342
      %v2344 = vsub.f32 %v2330, %v2342
      %v2345 = vmul.f32 %v2343, %v2343
      %v2346 = vmul.f32 %v2344, %v2344
      %v2347 = vsel %vm323, %v2345, 0.0
      %v2348 = vsel %vm323, %v2346, 0.0
      %v2349 = vadd.f32 %v2347, %v2348
      %v2350 = vrot.slane %v2349, 4
      %v2351 = vadd.f32 %v2349, %v2350
      %v2352 = vrot.slane %v2351, 2
      %v2353 = vadd.f32 %v2351, %v2352
      %v2354 = vrot.slane %v2353, 1
      %v2355 = vadd.f32 %v2353, %v2354
      %v2356 = vmul.f32 %v2355, %v1169
      %v2357 = vlaneseq
      %v2358 = vshrl.u32 %v2357, 7
      %v2359 = vsub.s32 0, %v2358
      %v2360 = vrot.slane %v476, %v2359
      %v2361 = vmul.f32 %v2360, %v2343
      %v2362 = vmul.f32 %v2360, %v2344
      %v2363 = vadd.f32 %v2356, 1e-05
      %v2364 = vrsqrt.pop %v2363
      %v2365 = vmul.f32 %v2361, %v2364
      %v2366 = vmul.f32 %v2362, %v2364
      %v2367 = vlaneseq
      %v2368 = vshrl.u32 %v2367, 7
      %v2369 = vsub.s32 0, %v2368
      %v2370 = vrot.slane %v477, %v2369
      %v2371 = vadd.f32 %v2365, %v2370
      %v2372 = vadd.f32 %v2366, %v2370
      %2373 = vst.msk [vmem:[#allocation4] sm:$0xff] %vm323, %v2371
      %2374 = vst.msk [vmem:[#allocation4 + $0x8] sm:$0xff] %vm323, %v2372
    $region37: #{tpu_custom_call.1} parent=1 // pred_fallthru
      _
    // Predicated region
    $region38: #{tpu_custom_call.1} parent=1 // pred_check
      _
    $region39: #{tpu_custom_call.1} parent=1 // pred_check_branch
      %2376 = sbr.rel (0) target = $region41
    $region40: #{tpu_custom_call.1} parent=1 // pred_region
      %s2378 = ssub.s32 256, 256
      %2379 = vsyncadd [#allocation5], %s2378
      %s2380 = sshll.u32 [#allocation4], 4
      %s2381 = int_to_ptr.vmem [resolvable:$true] %s2380
      %2386 = dma.vmem_to_hbm [thread:$0]  %s2381, 256, %s7, [#allocation5], 128, 128, 8
    $region41: #{tpu_custom_call.1} parent=1 // pred_fallthru
      _
    // Predicated region
    $region42: #{tpu_custom_call.1} parent=1 // pred_check
      _
    $region43: #{tpu_custom_call.1} parent=1 // pred_check_branch
      %2388 = sbr.rel (0) target = $region45
    $region44: #{tpu_custom_call.1} parent=1 // pred_region
      %2389 = dma.done [#allocation5], 256
    $region45: #{tpu_custom_call.1} parent=1 // pred_fallthru
      _
    %2390 = vsyncpa [#allocation5], 1

</llo_original>
